<compile_context>
chip_gen: v7x
topology: tpu7x:2x2x1
jax: 0.10.0
libtpu: 0.0.40
codegen_flags: <defaults>
</compile_context>

<pallas_src>
import functools
import math

import jax
import jax.numpy as jnp
from jax.experimental import pallas as pl
from jax.experimental.pallas import tpu as pltpu

ROW_TILE = 256   # target row tile (rows of the (M, D) activation slab)
COL_TILE = 512   # target output-column tile for wide weights (multiple of 128)


# ------------------------------ small helpers ------------------------------ #
def _round_up(x, m):
    return (x + m - 1) // m * m


def _row_tiling(m):
    """Pick a row tile (multiple of 8, capped at ROW_TILE) and the padded M."""
    tm = min(ROW_TILE, _round_up(m, 8))
    return tm, _round_up(m, tm)


def _pad_dim(x, target, axis):
    pad = target - x.shape[axis]
    if pad == 0:
        return x
    widths = [(0, 0)] * x.ndim
    widths[axis] = (0, pad)
    return jnp.pad(x, widths)


# ----------------------------- Pallas kernels ------------------------------ #
def _linear_kernel(x_ref, w_ref, b_ref, o_ref, *, relu):
    # bf16 operands on the MXU, f32 accumulation.
    y = jnp.dot(x_ref[...].astype(jnp.bfloat16), w_ref[...],
                preferred_element_type=jnp.float32)
    y = y + b_ref[...]
    if relu:
        y = jnp.maximum(y, 0.0)
    o_ref[...] = y


def _ffn_kernel(x_ref, w1_ref, b1_ref, w2_ref, b2_ref, o_ref):
    # Fused w1 + ReLU + w2 — the hidden activation never leaves VMEM.
    h = jnp.dot(x_ref[...].astype(jnp.bfloat16), w1_ref[...],
                preferred_element_type=jnp.float32) + b1_ref[...]
    h = jnp.maximum(h, 0.0)
    o_ref[...] = jnp.dot(h.astype(jnp.bfloat16), w2_ref[...],
                         preferred_element_type=jnp.float32) + b2_ref[...]


def _add_ln_kernel(x_ref, y_ref, g_ref, b_ref, o_ref):
    # Fused residual add + LayerNorm (f32 math).
    x = x_ref[...] + y_ref[...]
    mu = jnp.mean(x, axis=-1, keepdims=True)
    var = jnp.mean((x - mu) ** 2, axis=-1, keepdims=True)
    o_ref[...] = (x - mu) * jax.lax.rsqrt(var + 1e-5) * g_ref[...] + b_ref[...]


def _attention_kernel(q_ref, k_ref, v_ref, m_ref, o_ref, *, scale, causal):
    # One batch element per grid step, ALL heads at once (batched einsum).
    q = q_ref[0].astype(jnp.bfloat16)   # (H, Lq, Dh)
    k = k_ref[0].astype(jnp.bfloat16)   # (H, Lk, Dh)
    v = v_ref[0].astype(jnp.bfloat16)   # (H, Lk, Dh)

    s = jnp.einsum("hqd,hkd->hqk", q, k,
                   preferred_element_type=jnp.float32) * scale   # (H, Lq, Lk)

    # Compact keep mask: (1, Lk) key-pad or (Lq, 1) query-pad; broadcasts.
    keep = m_ref[0] != 0.0
    if causal:
        Lq, Lk = s.shape[1], s.shape[2]
        qi = jax.lax.broadcasted_iota(jnp.int32, (Lq, Lk), 0)
        ki = jax.lax.broadcasted_iota(jnp.int32, (Lq, Lk), 1)
        keep = jnp.logical_and(keep, ki <= qi)
    s = jnp.where(keep[None], s, -1e9)

    s = s - jnp.max(s, axis=-1, keepdims=True)
    p = jnp.exp(s)
    p = p * pl.reciprocal(jnp.sum(p, axis=-1, keepdims=True), approx=True)

    o_ref[0] = jnp.einsum("hqk,hkd->hqd", p.astype(jnp.bfloat16), v,
                          preferred_element_type=jnp.float32)


# ----------------------------- kernel wrappers ------------------------------ #
def linear(x, w, b, relu=False):
    """x: (M, K) @ w: (K, N) + b: (N,), optional fused ReLU. Row- and N-tiled."""
    M, K = x.shape
    N = w.shape[1]
    TM, Mp = _row_tiling(M)
    if N > COL_TILE:
        TN = COL_TILE
        Np = _round_up(N, TN)
    else:
        TN, Np = N, N

    xp = _pad_dim(x, Mp, 0)
    wp = _pad_dim(w, Np, 1)
    bp = _pad_dim(b.reshape(1, N), Np, 1)

    out = pl.pallas_call(
        functools.partial(_linear_kernel, relu=relu),
        out_shape=jax.ShapeDtypeStruct((Mp, Np), jnp.float32),
        grid=(Mp // TM, Np // TN),
        in_specs=[
            pl.BlockSpec((TM, K), lambda i, j: (i, 0)),
            pl.BlockSpec((K, TN), lambda i, j: (0, j)),
            pl.BlockSpec((1, TN), lambda i, j: (0, j)),
        ],
        out_specs=pl.BlockSpec((TM, TN), lambda i, j: (i, j)),
        compiler_params=pltpu.CompilerParams(
            dimension_semantics=("parallel", "parallel")),
    )(xp, wp, bp)

    if Mp != M or Np != N:
        out = out[:M, :N]
    return out


def add_layer_norm(x, y, g, b):
    """(x + y) -> LayerNorm, fused. x, y: (B, L, D)."""
    B, L, D = x.shape
    M = B * L
    TM, Mp = _row_tiling(M)
    xp = _pad_dim(x.reshape(M, D), Mp, 0)
    yp = _pad_dim(y.reshape(M, D), Mp, 0)
    out = pl.pallas_call(
        _add_ln_kernel,
        out_shape=jax.ShapeDtypeStruct((Mp, D), jnp.float32),
        grid=(Mp // TM,),
        in_specs=[
            pl.BlockSpec((TM, D), lambda i: (i, 0)),
            pl.BlockSpec((TM, D), lambda i: (i, 0)),
            pl.BlockSpec((1, D), lambda i: (0, 0)),
            pl.BlockSpec((1, D), lambda i: (0, 0)),
        ],
        out_specs=pl.BlockSpec((TM, D), lambda i: (i, 0)),
        compiler_params=pltpu.CompilerParams(dimension_semantics=("parallel",)),
    )(xp, yp, g.reshape(1, D), b.reshape(1, D))
    return out[:M].reshape(B, L, D)


def feed_forward(x, p):
    """Fused FFN: relu(x @ w1 + b1) @ w2 + b2 in one pallas_call."""
    B, L, D = x.shape
    M = B * L
    H = p["w1"].shape[1]
    TM, Mp = _row_tiling(M)
    xp = _pad_dim(x.reshape(M, D), Mp, 0)
    out = pl.pallas_call(
        _ffn_kernel,
        out_shape=jax.ShapeDtypeStruct((Mp, D), jnp.float32),
        grid=(Mp // TM,),
        in_specs=[
            pl.BlockSpec((TM, D), lambda i: (i, 0)),
            pl.BlockSpec((D, H), lambda i: (0, 0)),
            pl.BlockSpec((1, H), lambda i: (0, 0)),
            pl.BlockSpec((H, D), lambda i: (0, 0)),
            pl.BlockSpec((1, D), lambda i: (0, 0)),
        ],
        out_specs=pl.BlockSpec((TM, D), lambda i: (i, 0)),
        compiler_params=pltpu.CompilerParams(dimension_semantics=("parallel",)),
    )(xp, p["w1"], p["b1"].reshape(1, H), p["w2"], p["b2"].reshape(1, D))
    return out[:M].reshape(B, L, D)


def sdpa(q, k, v, keep, *, causal):
    """q/k/v: (B, H, L, Dh) f32; keep: (B,1,Lk) or (B,Lq,1) f32 (nonzero = keep)."""
    B, H, Lq, Dh = q.shape
    Lk = k.shape[2]
    return pl.pallas_call(
        functools.partial(_attention_kernel, scale=1.0 / math.sqrt(Dh),
                          causal=causal),
        out_shape=jax.ShapeDtypeStruct((B, H, Lq, Dh), jnp.float32),
        grid=(B,),
        in_specs=[
            pl.BlockSpec((1, H, Lq, Dh), lambda b: (b, 0, 0, 0)),
            pl.BlockSpec((1, H, Lk, Dh), lambda b: (b, 0, 0, 0)),
            pl.BlockSpec((1, H, Lk, Dh), lambda b: (b, 0, 0, 0)),
            pl.BlockSpec((1,) + keep.shape[1:], lambda b: (b, 0, 0)),
        ],
        out_specs=pl.BlockSpec((1, H, Lq, Dh), lambda b: (b, 0, 0, 0)),
        compiler_params=pltpu.CompilerParams(dimension_semantics=("parallel",)),
    )(q, k, v, keep)


# ------------------------------- model glue -------------------------------- #
def multi_head_attention(xq, xkv, keep, p, n_heads, *, causal):
    B, Lq, D = xq.shape
    Lk = xkv.shape[1]
    Dh = D // n_heads

    if xq is xkv:
        # Self-attention: single fused QKV matmul.
        qkv = linear(xq.reshape(-1, D), p["w_qkv"], p["b_qkv"])
        q2, k2, v2 = qkv[:, :D], qkv[:, D:2 * D], qkv[:, 2 * D:]
    else:
        # Cross-attention: Q from the decoder stream, fused KV from the encoder.
        q2 = linear(xq.reshape(-1, D), p["w_qkv"][:, :D], p["b_qkv"][:D])
        kv = linear(xkv.reshape(-1, D), p["w_qkv"][:, D:], p["b_qkv"][D:])
        k2, v2 = kv[:, :D], kv[:, D:]

    def to_heads(t, L):
        return t.reshape(B, L, n_heads, Dh).transpose(0, 2, 1, 3)

    oh = sdpa(to_heads(q2, Lq), to_heads(k2, Lk), to_heads(v2, Lk),
              keep, causal=causal)                      # (B, H, Lq, Dh)
    o = oh.transpose(0, 2, 1, 3).reshape(B * Lq, D)
    return linear(o, p["wo"], p["bo"]).reshape(B, Lq, D)


def encoder(src, src_keep, params, cfg):
    x = params["enc_emb"][src] + params["pe"][: src.shape[1]][None]
    for lp in params["enc_layers"]:
        a = multi_head_attention(x, x, src_keep, lp["attn"], cfg["n_heads"],
                                 causal=False)
        x = add_layer_norm(x, a, lp["ln1_g"], lp["ln1_b"])
        f = feed_forward(x, lp["ffn"])
        x = add_layer_norm(x, f, lp["ln2_g"], lp["ln2_b"])
    return x


def decoder(trg, enc_src, trg_keep, src_keep, params, cfg):
    x = params["dec_emb"][trg] + params["pe"][: trg.shape[1]][None]
    for lp in params["dec_layers"]:
        a = multi_head_attention(x, x, trg_keep, lp["self_attn"],
                                 cfg["n_heads"], causal=True)
        x = add_layer_norm(x, a, lp["ln1_g"], lp["ln1_b"])
        c = multi_head_attention(x, enc_src, src_keep, lp["cross_attn"],
                                 cfg["n_heads"], causal=False)
        x = add_layer_norm(x, c, lp["ln2_g"], lp["ln2_b"])
        f = feed_forward(x, lp["ffn"])
        x = add_layer_norm(x, f, lp["ln3_g"], lp["ln3_b"])
    B, L, D = x.shape
    return linear(x.reshape(-1, D), params["w_out"],
                  params["b_out"]).reshape(B, L, -1)


def transformer_forward(src, trg, params, cfg):
    # src mask = (src != pad) over the KEY axis  -> compact (B, 1, Ls)
    src_keep = (src != cfg["src_pad_idx"]).astype(jnp.float32)[:, None, :]
    # trg mask = (trg != pad) over the QUERY axis & causal (causal built in-kernel)
    trg_keep = (trg != cfg["trg_pad_idx"]).astype(jnp.float32)[:, :, None]
    enc_src = encoder(src, src_keep, params, cfg)
    return decoder(trg, enc_src, trg_keep, src_keep, params, cfg)


# ---------------------------- parameter init -------------------------------- #
def sinusoid_pe(max_len, d_model):
    pos = jnp.arange(max_len, dtype=jnp.float32)[:, None]
    i = jnp.arange(0, d_model, 2, dtype=jnp.float32)
    angle = pos / jnp.power(10000.0, i / d_model)
    pe = jnp.zeros((max_len, d_model), jnp.float32)
    pe = pe.at[:, 0::2].set(jnp.sin(angle))
    pe = pe.at[:, 1::2].set(jnp.cos(angle))
    return pe


def _dense(key, fan_in, fan_out):
    w = 0.02 * jax.random.normal(key, (fan_in, fan_out), jnp.float32)
    # Matmul weights stored in bf16 (halves HBM/VMEM traffic); biases stay f32.
    return w.astype(jnp.bfloat16), jnp.zeros((fan_out,), jnp.float32)


def _mha_params(key, d):
    kq, kk, kv, ko = jax.random.split(key, 4)
    wq, bq = _dense(kq, d, d)
    wk, bk = _dense(kk, d, d)
    wv, bv = _dense(kv, d, d)
    wo, bo = _dense(ko, d, d)
    return dict(
        w_qkv=jnp.concatenate([wq, wk, wv], axis=1),   # (D, 3D) fused QKV weight
        b_qkv=jnp.concatenate([bq, bk, bv], axis=0),   # (3D,)
        wo=wo, bo=bo)


def _ffn_params(key, d, h):
    k1, k2 = jax.random.split(key)
    w1, b1 = _dense(k1, d, h)
    w2, b2 = _dense(k2, h, d)
    return dict(w1=w1, b1=b1, w2=w2, b2=b2)


def init_params(key, cfg):
    d, h = cfg["d_model"], cfg["ffn_hidden"]
    keys = jax.random.split(key, 4 + 2 * cfg["n_layers"])
    params = {
        "enc_emb": 0.02 * jax.random.normal(keys[0], (cfg["src_vocab"], d), jnp.float32),
        "dec_emb": 0.02 * jax.random.normal(keys[1], (cfg["trg_vocab"], d), jnp.float32),
        "pe": sinusoid_pe(cfg["max_len"], d),
        "enc_layers": [],
        "dec_layers": [],
    }
    w_out, b_out = _dense(keys[2], d, cfg["trg_vocab"])
    params["w_out"], params["b_out"] = w_out, b_out
    ones, zeros = jnp.ones((d,), jnp.float32), jnp.zeros((d,), jnp.float32)
    for li in range(cfg["n_layers"]):
        ke = jax.random.split(keys[4 + li], 2)
        params["enc_layers"].append(dict(
            attn=_mha_params(ke[0], d), ffn=_ffn_params(ke[1], d, h),
            ln1_g=ones, ln1_b=zeros, ln2_g=ones, ln2_b=zeros))
        kd = jax.random.split(keys[4 + cfg["n_layers"] + li], 3)
        params["dec_layers"].append(dict(
            self_attn=_mha_params(kd[0], d), cross_attn=_mha_params(kd[1], d),
            ffn=_ffn_params(kd[2], d, h),
            ln1_g=ones, ln1_b=zeros, ln2_g=ones, ln2_b=zeros,
            ln3_g=ones, ln3_b=zeros))
    return params


# ---------------------------------- main ------------------------------------ #
if __name__ == "__main__":
    cfg = dict(d_model=32, n_heads=4, n_layers=2, ffn_hidden=64,
               src_vocab=50, trg_vocab=50, max_len=16,
               src_pad_idx=0, trg_pad_idx=0)

    key = jax.random.PRNGKey(0)
    k_src, k_trg, k_par = jax.random.split(key, 3)

    B, Ls, Lt = 2, 8, 8
    src = jax.random.randint(k_src, (B, Ls), 1, cfg["src_vocab"], dtype=jnp.int32)
    trg = jax.random.randint(k_trg, (B, Lt), 1, cfg["trg_vocab"], dtype=jnp.int32)
    # introduce some padding tokens to exercise the masks
    src = src.at[:, -2:].set(cfg["src_pad_idx"])
    trg = trg.at[:, -1:].set(cfg["trg_pad_idx"])

    params = init_params(k_par, cfg)

    fwd = jax.jit(lambda s, t, p: transformer_forward(s, t, p, cfg))
    out = fwd(src, trg, params)
    out = jax.block_until_ready(out)

    assert out.shape == (B, Lt, cfg["trg_vocab"]), out.shape
    assert bool(jnp.all(jnp.isfinite(out)))
    print("KERNEL_OK")
</pallas_src>

<mosaic_0001>
module attributes {stable_mosaic.version = 11 : i64} {
  func.func @_linear_kernel(%arg0: i32, %arg1: i32, %arg2: memref<16x32xf32, #tpu.memory_space<vmem>>, %arg3: memref<32x96xbf16, #tpu.memory_space<vmem>>, %arg4: memref<1x96xf32, #tpu.memory_space<vmem>>, %arg5: memref<16x96xf32, #tpu.memory_space<vmem>>) attributes {dimension_semantics = [#tpu.dimension_semantics<parallel>, #tpu.dimension_semantics<parallel>], iteration_bounds = array<i64: 1, 1>, scalar_prefetch = 0 : i64, scratch_operands = 0 : i64, tpu.core_type = #tpu.core_type<tc>, window_params = [{transform_indices = @transform_0, window_bounds = array<i64: 16, 32>}, {transform_indices = @transform_1, window_bounds = array<i64: 32, 96>}, {transform_indices = @transform_2, window_bounds = array<i64: 1, 96>}, {transform_indices = @transform_3, window_bounds = array<i64: 16, 96>}]} {
    %c0 = arith.constant 0 : index
    %c0_0 = arith.constant 0 : index
    %0 = vector.load %arg2[%c0, %c0_0] : memref<16x32xf32, #tpu.memory_space<vmem>>, vector<16x32xf32>
    %1 = arith.truncf %0 : vector<16x32xf32> to vector<16x32xbf16>
    %c0_1 = arith.constant 0 : index
    %c0_2 = arith.constant 0 : index
    %2 = vector.load %arg3[%c0_1, %c0_2] : memref<32x96xbf16, #tpu.memory_space<vmem>>, vector<32x96xbf16>
    %cst = arith.constant dense<0.000000e+00> : vector<16x96xf32>
    %3 = tpu.matmul %1, %2, %cst {dimension_numbers = #tpu.dot_dimension_numbers<[1], [0], [0], [1], [0, 0, 1, 1], [], []>} : vector<16x32xbf16>, vector<32x96xbf16>, vector<16x96xf32> -> vector<16x96xf32>
    %c0_3 = arith.constant 0 : index
    %c0_4 = arith.constant 0 : index
    %4 = vector.load %arg4[%c0_3, %c0_4] : memref<1x96xf32, #tpu.memory_space<vmem>>, vector<1x96xf32>
    %5 = vector.broadcast %4 : vector<1x96xf32> to vector<16x96xf32>
    %6 = arith.addf %3, %5 : vector<16x96xf32>
    %c0_5 = arith.constant 0 : index
    %c0_6 = arith.constant 0 : index
    %7 = vector.load %arg5[%c0_5, %c0_6] : memref<16x96xf32, #tpu.memory_space<vmem>>, vector<16x96xf32>
    tpu.vector_store %arg5[%c0_5, %c0_6], %6 {strides = array<i32>} : memref<16x96xf32, #tpu.memory_space<vmem>>, vector<16x96xf32>,
    return
  }
  func.func @transform_0(%arg0: i32, %arg1: i32) -> (i32, i32) {
    %c0_i32 = arith.constant 0 : i32
    %c0_i32_0 = arith.constant 0 : i32
    return %arg0, %c0_i32 : i32, i32
  }
  func.func @transform_1(%arg0: i32, %arg1: i32) -> (i32, i32) {
    %c0_i32 = arith.constant 0 : i32
    %c0_i32_0 = arith.constant 0 : i32
    return %c0_i32, %arg1 : i32, i32
  }
  func.func @transform_2(%arg0: i32, %arg1: i32) -> (i32, i32) {
    %c0_i32 = arith.constant 0 : i32
    %c0_i32_0 = arith.constant 0 : i32
    return %c0_i32, %arg1 : i32, i32
  }
  func.func @transform_3(%arg0: i32, %arg1: i32) -> (i32, i32) {
    %c0_i32 = arith.constant 0 : i32
    return %arg0, %arg1 : i32, i32
  }
}

module attributes {stable_mosaic.version = 11 : i64} {
  func.func @_linear_kernel(%arg0: i32, %arg1: i32, %arg2: memref<16x32xf32, #tpu.memory_space<vmem>>, %arg3: memref<32x32xbf16, #tpu.memory_space<vmem>>, %arg4: memref<1x32xf32, #tpu.memory_space<vmem>>, %arg5: memref<16x32xf32, #tpu.memory_space<vmem>>) attributes {dimension_semantics = [#tpu.dimension_semantics<parallel>, #tpu.dimension_semantics<parallel>], iteration_bounds = array<i64: 1, 1>, scalar_prefetch = 0 : i64, scratch_operands = 0 : i64, tpu.core_type = #tpu.core_type<tc>, window_params = [{transform_indices = @transform_0, window_bounds = array<i64: 16, 32>}, {transform_indices = @transform_1, window_bounds = array<i64: 32, 32>}, {transform_indices = @transform_2, window_bounds = array<i64: 1, 32>}, {transform_indices = @transform_3, window_bounds = array<i64: 16, 32>}]} {
    %c0 = arith.constant 0 : index
    %c0_0 = arith.constant 0 : index
    %0 = vector.load %arg2[%c0, %c0_0] : memref<16x32xf32, #tpu.memory_space<vmem>>, vector<16x32xf32>
    %1 = arith.truncf %0 : vector<16x32xf32> to vector<16x32xbf16>
    %c0_1 = arith.constant 0 : index
    %c0_2 = arith.constant 0 : index
    %2 = vector.load %arg3[%c0_1, %c0_2] : memref<32x32xbf16, #tpu.memory_space<vmem>>, vector<32x32xbf16>
    %cst = arith.constant dense<0.000000e+00> : vector<16x32xf32>
    %3 = tpu.matmul %1, %2, %cst {dimension_numbers = #tpu.dot_dimension_numbers<[1], [0], [0], [1], [0, 0, 1, 1], [], []>} : vector<16x32xbf16>, vector<32x32xbf16>, vector<16x32xf32> -> vector<16x32xf32>
    %c0_3 = arith.constant 0 : index
    %c0_4 = arith.constant 0 : index
    %4 = vector.load %arg4[%c0_3, %c0_4] : memref<1x32xf32, #tpu.memory_space<vmem>>, vector<1x32xf32>
    %5 = vector.broadcast %4 : vector<1x32xf32> to vector<16x32xf32>
    %6 = arith.addf %3, %5 : vector<16x32xf32>
    %c0_5 = arith.constant 0 : index
    %c0_6 = arith.constant 0 : index
    %7 = vector.load %arg5[%c0_5, %c0_6] : memref<16x32xf32, #tpu.memory_space<vmem>>, vector<16x32xf32>
    tpu.vector_store %arg5[%c0_5, %c0_6], %6 {strides = array<i32>} : memref<16x32xf32, #tpu.memory_space<vmem>>, vector<16x32xf32>,
    return
  }
  func.func @transform_0(%arg0: i32, %arg1: i32) -> (i32, i32) {
    %c0_i32 = arith.constant 0 : i32
    %c0_i32_0 = arith.constant 0 : i32
    return %arg0, %c0_i32 : i32, i32
  }
  func.func @transform_1(%arg0: i32, %arg1: i32) -> (i32, i32) {
    %c0_i32 = arith.constant 0 : i32
    %c0_i32_0 = arith.constant 0 : i32
    return %c0_i32, %arg1 : i32, i32
  }
  func.func @transform_2(%arg0: i32, %arg1: i32) -> (i32, i32) {
    %c0_i32 = arith.constant 0 : i32
    %c0_i32_0 = arith.constant 0 : i32
    return %c0_i32, %arg1 : i32, i32
  }
  func.func @transform_3(%arg0: i32, %arg1: i32) -> (i32, i32) {
    %c0_i32 = arith.constant 0 : i32
    return %arg0, %arg1 : i32, i32
  }
}

module attributes {stable_mosaic.version = 11 : i64} {
  func.func @_attention_kernel(%arg0: i32, %arg1: memref<1x4x8x8xf32, #tpu.memory_space<vmem>>, %arg2: memref<1x4x8x8xf32, #tpu.memory_space<vmem>>, %arg3: memref<1x4x8x8xf32, #tpu.memory_space<vmem>>, %arg4: memref<1x8x1xf32, #tpu.memory_space<vmem>>, %arg5: memref<1x4x8x8xf32, #tpu.memory_space<vmem>>) attributes {dimension_semantics = [#tpu.dimension_semantics<parallel>], iteration_bounds = array<i64: 2>, scalar_prefetch = 0 : i64, scratch_operands = 0 : i64, tpu.core_type = #tpu.core_type<tc>, window_params = [{transform_indices = @transform_0, window_bounds = array<i64: 1, 4, 8, 8>}, {transform_indices = @transform_1, window_bounds = array<i64: 1, 4, 8, 8>}, {transform_indices = @transform_2, window_bounds = array<i64: 1, 4, 8, 8>}, {transform_indices = @transform_3, window_bounds = array<i64: 1, 8, 1>}, {transform_indices = @transform_4, window_bounds = array<i64: 1, 4, 8, 8>}]} {
    %c0 = arith.constant 0 : index
    %c0_0 = arith.constant 0 : index
    %c0_1 = arith.constant 0 : index
    %c0_2 = arith.constant 0 : index
    %0 = vector.load %arg1[%c0, %c0_0, %c0_1, %c0_2] : memref<1x4x8x8xf32, #tpu.memory_space<vmem>>, vector<1x4x8x8xf32>
    %1 = vector.shape_cast %0 : vector<1x4x8x8xf32> to vector<4x8x8xf32>
    %2 = arith.truncf %1 : vector<4x8x8xf32> to vector<4x8x8xbf16>
    %c0_3 = arith.constant 0 : index
    %c0_4 = arith.constant 0 : index
    %c0_5 = arith.constant 0 : index
    %c0_6 = arith.constant 0 : index
    %3 = vector.load %arg2[%c0_3, %c0_4, %c0_5, %c0_6] : memref<1x4x8x8xf32, #tpu.memory_space<vmem>>, vector<1x4x8x8xf32>
    %4 = vector.shape_cast %3 : vector<1x4x8x8xf32> to vector<4x8x8xf32>
    %5 = arith.truncf %4 : vector<4x8x8xf32> to vector<4x8x8xbf16>
    %c0_7 = arith.constant 0 : index
    %c0_8 = arith.constant 0 : index
    %c0_9 = arith.constant 0 : index
    %c0_10 = arith.constant 0 : index
    %6 = vector.load %arg3[%c0_7, %c0_8, %c0_9, %c0_10] : memref<1x4x8x8xf32, #tpu.memory_space<vmem>>, vector<1x4x8x8xf32>
    %7 = vector.shape_cast %6 : vector<1x4x8x8xf32> to vector<4x8x8xf32>
    %8 = arith.truncf %7 : vector<4x8x8xf32> to vector<4x8x8xbf16>
    "tpu.trace_start"() <{level = 10 : i32, message = "hqd,hkd->hqk"}> : () -> ()
    %cst = arith.constant dense<0.000000e+00> : vector<4x8x8xf32>
    %9 = tpu.matmul %2, %5, %cst {dimension_numbers = #tpu.dot_dimension_numbers<[2], [2], [1], [1], [0, 0, 0, 1, 1, 1], [0], [0]>} : vector<4x8x8xbf16>, vector<4x8x8xbf16>, vector<4x8x8xf32> -> vector<4x8x8xf32>
    "tpu.trace_stop"() : () -> ()
    %cst_11 = arith.constant 0.353553385 : f32
    %10 = vector.broadcast %cst_11 : f32 to vector<4x8x8xf32>
    %11 = arith.mulf %9, %10 : vector<4x8x8xf32>
    %c0_12 = arith.constant 0 : index
    %c0_13 = arith.constant 0 : index
    %c0_14 = arith.constant 0 : index
    %12 = vector.load %arg4[%c0_12, %c0_13, %c0_14] : memref<1x8x1xf32, #tpu.memory_space<vmem>>, vector<1x8x1xf32>
    %13 = vector.shape_cast %12 : vector<1x8x1xf32> to vector<8x1xf32>
    %cst_15 = arith.constant 0.000000e+00 : f32
    %14 = vector.broadcast %cst_15 : f32 to vector<8x1xf32>
    %15 = arith.cmpf one, %13, %14 : vector<8x1xf32>
    %16 = tpu.iota {dimensions = array<i32: 0>} : vector<8x8xi32>
    %17 = tpu.iota {dimensions = array<i32: 1>} : vector<8x8xi32>
    %18 = arith.cmpi sle, %17, %16 : vector<8x8xi32>
    %19 = vector.broadcast %15 : vector<8x1xi1> to vector<8x8xi1>
    %20 = arith.andi %19, %18 : vector<8x8xi1>
    %21 = vector.shape_cast %20 : vector<8x8xi1> to vector<1x8x8xi1>
    %cst_16 = arith.constant -1.000000e+09 : f32
    %22 = vector.shape_cast %21 : vector<1x8x8xi1> to vector<1x8x8xi1>
    %23 = vector.broadcast %22 : vector<1x8x8xi1> to vector<4x8x8xi1>
    %24 = vector.broadcast %cst_16 : f32 to vector<4x8x8xf32>
    %25 = arith.select %23, %11, %24 : vector<4x8x8xi1>, vector<4x8x8xf32>
    %cst_17 = arith.constant dense<0xFF800000> : vector<4x8xf32>
    %26 = vector.multi_reduction <maximumf>, %25, %cst_17 [2] : vector<4x8x8xf32> to vector<4x8xf32>
    %27 = vector.shape_cast %26 : vector<4x8xf32> to vector<4x8x1xf32>
    %28 = vector.broadcast %27 : vector<4x8x1xf32> to vector<4x8x8xf32>
    %29 = arith.subf %25, %28 : vector<4x8x8xf32>
    %30 = math.exp %29 : vector<4x8x8xf32>
    %cst_18 = arith.constant dense<0.000000e+00> : vector<4x8xf32>
    %31 = vector.multi_reduction <add>, %30, %cst_18 [2] : vector<4x8x8xf32> to vector<4x8xf32>
    %32 = vector.shape_cast %31 : vector<4x8xf32> to vector<4x8x1xf32>
    %33 = tpu.reciprocal %32 {approx = true} : vector<4x8x1xf32> -> vector<4x8x1xf32>
    %34 = vector.broadcast %33 : vector<4x8x1xf32> to vector<4x8x8xf32>
    %35 = arith.mulf %30, %34 : vector<4x8x8xf32>
    %36 = arith.truncf %35 : vector<4x8x8xf32> to vector<4x8x8xbf16>
    "tpu.trace_start"() <{level = 10 : i32, message = "hqk,hkd->hqd"}> : () -> ()
    %cst_19 = arith.constant dense<0.000000e+00> : vector<4x8x8xf32>
    %37 = tpu.matmul %36, %8, %cst_19 {dimension_numbers = #tpu.dot_dimension_numbers<[2], [1], [1], [2], [0, 0, 0, 1, 1, 2], [0], [0]>} : vector<4x8x8xbf16>, vector<4x8x8xbf16>, vector<4x8x8xf32> -> vector<4x8x8xf32>
    "tpu.trace_stop"() : () -> ()
    %c0_20 = arith.constant 0 : index
    %c0_21 = arith.constant 0 : index
    %c0_22 = arith.constant 0 : index
    %c0_23 = arith.constant 0 : index
    %38 = vector.load %arg5[%c0_20, %c0_21, %c0_22, %c0_23] : memref<1x4x8x8xf32, #tpu.memory_space<vmem>>, vector<1x4x8x8xf32>
    %39 = vector.shape_cast %38 : vector<1x4x8x8xf32> to vector<4x8x8xf32>
    %40 = vector.shape_cast %37 : vector<4x8x8xf32> to vector<1x4x8x8xf32>
    tpu.vector_store %arg5[%c0_20, %c0_21, %c0_22, %c0_23], %40 {strides = array<i32>} : memref<1x4x8x8xf32, #tpu.memory_space<vmem>>, vector<1x4x8x8xf32>,
    return
  }
  func.func @transform_0(%arg0: i32) -> (i32, i32, i32, i32) {
    %c0_i32 = arith.constant 0 : i32
    %c0_i32_0 = arith.constant 0 : i32
    %c0_i32_1 = arith.constant 0 : i32
    %c0_i32_2 = arith.constant 0 : i32
    return %arg0, %c0_i32, %c0_i32_0, %c0_i32_1 : i32, i32, i32, i32
  }
  func.func @transform_1(%arg0: i32) -> (i32, i32, i32, i32) {
    %c0_i32 = arith.constant 0 : i32
    %c0_i32_0 = arith.constant 0 : i32
    %c0_i32_1 = arith.constant 0 : i32
    %c0_i32_2 = arith.constant 0 : i32
    return %arg0, %c0_i32, %c0_i32_0, %c0_i32_1 : i32, i32, i32, i32
  }
  func.func @transform_2(%arg0: i32) -> (i32, i32, i32, i32) {
    %c0_i32 = arith.constant 0 : i32
    %c0_i32_0 = arith.constant 0 : i32
    %c0_i32_1 = arith.constant 0 : i32
    %c0_i32_2 = arith.constant 0 : i32
    return %arg0, %c0_i32, %c0_i32_0, %c0_i32_1 : i32, i32, i32, i32
  }
  func.func @transform_3(%arg0: i32) -> (i32, i32, i32) {
    %c0_i32 = arith.constant 0 : i32
    %c0_i32_0 = arith.constant 0 : i32
    %c0_i32_1 = arith.constant 0 : i32
    return %arg0, %c0_i32, %c0_i32_0 : i32, i32, i32
  }
  func.func @transform_4(%arg0: i32) -> (i32, i32, i32, i32) {
    %c0_i32 = arith.constant 0 : i32
    %c0_i32_0 = arith.constant 0 : i32
    %c0_i32_1 = arith.constant 0 : i32
    %c0_i32_2 = arith.constant 0 : i32
    return %arg0, %c0_i32, %c0_i32_0, %c0_i32_1 : i32, i32, i32, i32
  }
}

module attributes {stable_mosaic.version = 11 : i64} {
  func.func @_add_ln_kernel(%arg0: i32, %arg1: memref<16x32xf32, #tpu.memory_space<vmem>>, %arg2: memref<16x32xf32, #tpu.memory_space<vmem>>, %arg3: memref<1x32xf32, #tpu.memory_space<vmem>>, %arg4: memref<1x32xf32, #tpu.memory_space<vmem>>, %arg5: memref<16x32xf32, #tpu.memory_space<vmem>>) attributes {dimension_semantics = [#tpu.dimension_semantics<parallel>], iteration_bounds = array<i64: 1>, scalar_prefetch = 0 : i64, scratch_operands = 0 : i64, tpu.core_type = #tpu.core_type<tc>, window_params = [{transform_indices = @transform_0, window_bounds = array<i64: 16, 32>}, {transform_indices = @transform_1, window_bounds = array<i64: 16, 32>}, {pipeline_mode = #tpu.pipeline_mode<synchronous>, transform_indices = @transform_2, window_bounds = array<i64: 1, 32>}, {pipeline_mode = #tpu.pipeline_mode<synchronous>, transform_indices = @transform_3, window_bounds = array<i64: 1, 32>}, {transform_indices = @transform_4, window_bounds = array<i64: 16, 32>}]} {
    %c0 = arith.constant 0 : index
    %c0_0 = arith.constant 0 : index
    %0 = vector.load %arg1[%c0, %c0_0] : memref<16x32xf32, #tpu.memory_space<vmem>>, vector<16x32xf32>
    %c0_1 = arith.constant 0 : index
    %c0_2 = arith.constant 0 : index
    %1 = vector.load %arg2[%c0_1, %c0_2] : memref<16x32xf32, #tpu.memory_space<vmem>>, vector<16x32xf32>
    %2 = arith.addf %0, %1 : vector<16x32xf32>
    %cst = arith.constant dense<0.000000e+00> : vector<16xf32>
    %3 = vector.multi_reduction <add>, %2, %cst [1] : vector<16x32xf32> to vector<16xf32>
    %4 = vector.shape_cast %3 : vector<16xf32> to vector<16x1xf32>
    %cst_3 = arith.constant 3.200000e+01 : f32
    %5 = vector.broadcast %cst_3 : f32 to vector<16x1xf32>
    %6 = arith.divf %4, %5 : vector<16x1xf32>
    %7 = vector.broadcast %6 : vector<16x1xf32> to vector<16x32xf32>
    %8 = arith.subf %2, %7 : vector<16x32xf32>
    %9 = arith.mulf %8, %8 : vector<16x32xf32>
    %cst_4 = arith.constant dense<0.000000e+00> : vector<16xf32>
    %10 = vector.multi_reduction <add>, %9, %cst_4 [1] : vector<16x32xf32> to vector<16xf32>
    %11 = vector.shape_cast %10 : vector<16xf32> to vector<16x1xf32>
    %cst_5 = arith.constant 3.200000e+01 : f32
    %12 = vector.broadcast %cst_5 : f32 to vector<16x1xf32>
    %13 = arith.divf %11, %12 : vector<16x1xf32>
    %14 = vector.broadcast %6 : vector<16x1xf32> to vector<16x32xf32>
    %15 = arith.subf %2, %14 : vector<16x32xf32>
    %cst_6 = arith.constant 9.99999974E-6 : f32
    %16 = vector.broadcast %cst_6 : f32 to vector<16x1xf32>
    %17 = arith.addf %13, %16 : vector<16x1xf32>
    %18 = math.rsqrt %17 : vector<16x1xf32>
    %19 = vector.broadcast %18 : vector<16x1xf32> to vector<16x32xf32>
    %20 = arith.mulf %15, %19 : vector<16x32xf32>
    %c0_7 = arith.constant 0 : index
    %c0_8 = arith.constant 0 : index
    %21 = vector.load %arg3[%c0_7, %c0_8] : memref<1x32xf32, #tpu.memory_space<vmem>>, vector<1x32xf32>
    %22 = vector.broadcast %21 : vector<1x32xf32> to vector<16x32xf32>
    %23 = arith.mulf %20, %22 : vector<16x32xf32>
    %c0_9 = arith.constant 0 : index
    %c0_10 = arith.constant 0 : index
    %24 = vector.load %arg4[%c0_9, %c0_10] : memref<1x32xf32, #tpu.memory_space<vmem>>, vector<1x32xf32>
    %25 = vector.broadcast %24 : vector<1x32xf32> to vector<16x32xf32>
    %26 = arith.addf %23, %25 : vector<16x32xf32>
    %c0_11 = arith.constant 0 : index
    %c0_12 = arith.constant 0 : index
    %27 = vector.load %arg5[%c0_11, %c0_12] : memref<16x32xf32, #tpu.memory_space<vmem>>, vector<16x32xf32>
    tpu.vector_store %arg5[%c0_11, %c0_12], %26 {strides = array<i32>} : memref<16x32xf32, #tpu.memory_space<vmem>>, vector<16x32xf32>,
    return
  }
  func.func @transform_0(%arg0: i32) -> (i32, i32) {
    %c0_i32 = arith.constant 0 : i32
    %c0_i32_0 = arith.constant 0 : i32
    return %arg0, %c0_i32 : i32, i32
  }
  func.func @transform_1(%arg0: i32) -> (i32, i32) {
    %c0_i32 = arith.constant 0 : i32
    %c0_i32_0 = arith.constant 0 : i32
    return %arg0, %c0_i32 : i32, i32
  }
  func.func @transform_2(%arg0: i32) -> (i32, i32) {
    %c0_i32 = arith.constant 0 : i32
    %c0_i32_0 = arith.constant 0 : i32
    %c0_i32_1 = arith.constant 0 : i32
    return %c0_i32, %c0_i32_0 : i32, i32
  }
  func.func @transform_3(%arg0: i32) -> (i32, i32) {
    %c0_i32 = arith.constant 0 : i32
    %c0_i32_0 = arith.constant 0 : i32
    %c0_i32_1 = arith.constant 0 : i32
    return %c0_i32, %c0_i32_0 : i32, i32
  }
  func.func @transform_4(%arg0: i32) -> (i32, i32) {
    %c0_i32 = arith.constant 0 : i32
    %c0_i32_0 = arith.constant 0 : i32
    return %arg0, %c0_i32 : i32, i32
  }
}

module attributes {stable_mosaic.version = 11 : i64} {
  func.func @_ffn_kernel(%arg0: i32, %arg1: memref<16x32xf32, #tpu.memory_space<vmem>>, %arg2: memref<32x64xbf16, #tpu.memory_space<vmem>>, %arg3: memref<1x64xf32, #tpu.memory_space<vmem>>, %arg4: memref<64x32xbf16, #tpu.memory_space<vmem>>, %arg5: memref<1x32xf32, #tpu.memory_space<vmem>>, %arg6: memref<16x32xf32, #tpu.memory_space<vmem>>) attributes {dimension_semantics = [#tpu.dimension_semantics<parallel>], iteration_bounds = array<i64: 1>, scalar_prefetch = 0 : i64, scratch_operands = 0 : i64, tpu.core_type = #tpu.core_type<tc>, window_params = [{transform_indices = @transform_0, window_bounds = array<i64: 16, 32>}, {pipeline_mode = #tpu.pipeline_mode<synchronous>, transform_indices = @transform_1, window_bounds = array<i64: 32, 64>}, {pipeline_mode = #tpu.pipeline_mode<synchronous>, transform_indices = @transform_2, window_bounds = array<i64: 1, 64>}, {pipeline_mode = #tpu.pipeline_mode<synchronous>, transform_indices = @transform_3, window_bounds = array<i64: 64, 32>}, {pipeline_mode = #tpu.pipeline_mode<synchronous>, transform_indices = @transform_4, window_bounds = array<i64: 1, 32>}, {transform_indices = @transform_5, window_bounds = array<i64: 16, 32>}]} {
    %c0 = arith.constant 0 : index
    %c0_0 = arith.constant 0 : index
    %0 = vector.load %arg1[%c0, %c0_0] : memref<16x32xf32, #tpu.memory_space<vmem>>, vector<16x32xf32>
    %1 = arith.truncf %0 : vector<16x32xf32> to vector<16x32xbf16>
    %c0_1 = arith.constant 0 : index
    %c0_2 = arith.constant 0 : index
    %2 = vector.load %arg2[%c0_1, %c0_2] : memref<32x64xbf16, #tpu.memory_space<vmem>>, vector<32x64xbf16>
    %cst = arith.constant dense<0.000000e+00> : vector<16x64xf32>
    %3 = tpu.matmul %1, %2, %cst {dimension_numbers = #tpu.dot_dimension_numbers<[1], [0], [0], [1], [0, 0, 1, 1], [], []>} : vector<16x32xbf16>, vector<32x64xbf16>, vector<16x64xf32> -> vector<16x64xf32>
    %c0_3 = arith.constant 0 : index
    %c0_4 = arith.constant 0 : index
    %4 = vector.load %arg3[%c0_3, %c0_4] : memref<1x64xf32, #tpu.memory_space<vmem>>, vector<1x64xf32>
    %5 = vector.broadcast %4 : vector<1x64xf32> to vector<16x64xf32>
    %6 = arith.addf %3, %5 : vector<16x64xf32>
    %cst_5 = arith.constant 0.000000e+00 : f32
    %7 = vector.broadcast %cst_5 : f32 to vector<16x64xf32>
    %8 = arith.maximumf %6, %7 : vector<16x64xf32>
    %9 = arith.truncf %8 : vector<16x64xf32> to vector<16x64xbf16>
    %c0_6 = arith.constant 0 : index
    %c0_7 = arith.constant 0 : index
    %10 = vector.load %arg4[%c0_6, %c0_7] : memref<64x32xbf16, #tpu.memory_space<vmem>>, vector<64x32xbf16>
    %cst_8 = arith.constant dense<0.000000e+00> : vector<16x32xf32>
    %11 = tpu.matmul %9, %10, %cst_8 {dimension_numbers = #tpu.dot_dimension_numbers<[1], [0], [0], [1], [0, 0, 1, 1], [], []>} : vector<16x64xbf16>, vector<64x32xbf16>, vector<16x32xf32> -> vector<16x32xf32>
    %c0_9 = arith.constant 0 : index
    %c0_10 = arith.constant 0 : index
    %12 = vector.load %arg5[%c0_9, %c0_10] : memref<1x32xf32, #tpu.memory_space<vmem>>, vector<1x32xf32>
    %13 = vector.broadcast %12 : vector<1x32xf32> to vector<16x32xf32>
    %14 = arith.addf %11, %13 : vector<16x32xf32>
    %c0_11 = arith.constant 0 : index
    %c0_12 = arith.constant 0 : index
    %15 = vector.load %arg6[%c0_11, %c0_12] : memref<16x32xf32, #tpu.memory_space<vmem>>, vector<16x32xf32>
    tpu.vector_store %arg6[%c0_11, %c0_12], %14 {strides = array<i32>} : memref<16x32xf32, #tpu.memory_space<vmem>>, vector<16x32xf32>,
    return
  }
  func.func @transform_0(%arg0: i32) -> (i32, i32) {
    %c0_i32 = arith.constant 0 : i32
    %c0_i32_0 = arith.constant 0 : i32
    return %arg0, %c0_i32 : i32, i32
  }
  func.func @transform_1(%arg0: i32) -> (i32, i32) {
    %c0_i32 = arith.constant 0 : i32
    %c0_i32_0 = arith.constant 0 : i32
    %c0_i32_1 = arith.constant 0 : i32
    return %c0_i32, %c0_i32_0 : i32, i32
  }
  func.func @transform_2(%arg0: i32) -> (i32, i32) {
    %c0_i32 = arith.constant 0 : i32
    %c0_i32_0 = arith.constant 0 : i32
    %c0_i32_1 = arith.constant 0 : i32
    return %c0_i32, %c0_i32_0 : i32, i32
  }
  func.func @transform_3(%arg0: i32) -> (i32, i32) {
    %c0_i32 = arith.constant 0 : i32
    %c0_i32_0 = arith.constant 0 : i32
    %c0_i32_1 = arith.constant 0 : i32
    return %c0_i32, %c0_i32_0 : i32, i32
  }
  func.func @transform_4(%arg0: i32) -> (i32, i32) {
    %c0_i32 = arith.constant 0 : i32
    %c0_i32_0 = arith.constant 0 : i32
    %c0_i32_1 = arith.constant 0 : i32
    return %c0_i32, %c0_i32_0 : i32, i32
  }
  func.func @transform_5(%arg0: i32) -> (i32, i32) {
    %c0_i32 = arith.constant 0 : i32
    %c0_i32_0 = arith.constant 0 : i32
    return %arg0, %c0_i32 : i32, i32
  }
}

module attributes {stable_mosaic.version = 11 : i64} {
  func.func @_attention_kernel(%arg0: i32, %arg1: memref<1x4x8x8xf32, #tpu.memory_space<vmem>>, %arg2: memref<1x4x8x8xf32, #tpu.memory_space<vmem>>, %arg3: memref<1x4x8x8xf32, #tpu.memory_space<vmem>>, %arg4: memref<1x1x8xf32, #tpu.memory_space<vmem>>, %arg5: memref<1x4x8x8xf32, #tpu.memory_space<vmem>>) attributes {dimension_semantics = [#tpu.dimension_semantics<parallel>], iteration_bounds = array<i64: 2>, scalar_prefetch = 0 : i64, scratch_operands = 0 : i64, tpu.core_type = #tpu.core_type<tc>, window_params = [{transform_indices = @transform_0, window_bounds = array<i64: 1, 4, 8, 8>}, {transform_indices = @transform_1, window_bounds = array<i64: 1, 4, 8, 8>}, {transform_indices = @transform_2, window_bounds = array<i64: 1, 4, 8, 8>}, {transform_indices = @transform_3, window_bounds = array<i64: 1, 1, 8>}, {transform_indices = @transform_4, window_bounds = array<i64: 1, 4, 8, 8>}]} {
    %c0 = arith.constant 0 : index
    %c0_0 = arith.constant 0 : index
    %c0_1 = arith.constant 0 : index
    %c0_2 = arith.constant 0 : index
    %0 = vector.load %arg1[%c0, %c0_0, %c0_1, %c0_2] : memref<1x4x8x8xf32, #tpu.memory_space<vmem>>, vector<1x4x8x8xf32>
    %1 = vector.shape_cast %0 : vector<1x4x8x8xf32> to vector<4x8x8xf32>
    %2 = arith.truncf %1 : vector<4x8x8xf32> to vector<4x8x8xbf16>
    %c0_3 = arith.constant 0 : index
    %c0_4 = arith.constant 0 : index
    %c0_5 = arith.constant 0 : index
    %c0_6 = arith.constant 0 : index
    %3 = vector.load %arg2[%c0_3, %c0_4, %c0_5, %c0_6] : memref<1x4x8x8xf32, #tpu.memory_space<vmem>>, vector<1x4x8x8xf32>
    %4 = vector.shape_cast %3 : vector<1x4x8x8xf32> to vector<4x8x8xf32>
    %5 = arith.truncf %4 : vector<4x8x8xf32> to vector<4x8x8xbf16>
    %c0_7 = arith.constant 0 : index
    %c0_8 = arith.constant 0 : index
    %c0_9 = arith.constant 0 : index
    %c0_10 = arith.constant 0 : index
    %6 = vector.load %arg3[%c0_7, %c0_8, %c0_9, %c0_10] : memref<1x4x8x8xf32, #tpu.memory_space<vmem>>, vector<1x4x8x8xf32>
    %7 = vector.shape_cast %6 : vector<1x4x8x8xf32> to vector<4x8x8xf32>
    %8 = arith.truncf %7 : vector<4x8x8xf32> to vector<4x8x8xbf16>
    "tpu.trace_start"() <{level = 10 : i32, message = "hqd,hkd->hqk"}> : () -> ()
    %cst = arith.constant dense<0.000000e+00> : vector<4x8x8xf32>
    %9 = tpu.matmul %2, %5, %cst {dimension_numbers = #tpu.dot_dimension_numbers<[2], [2], [1], [1], [0, 0, 0, 1, 1, 1], [0], [0]>} : vector<4x8x8xbf16>, vector<4x8x8xbf16>, vector<4x8x8xf32> -> vector<4x8x8xf32>
    "tpu.trace_stop"() : () -> ()
    %cst_11 = arith.constant 0.353553385 : f32
    %10 = vector.broadcast %cst_11 : f32 to vector<4x8x8xf32>
    %11 = arith.mulf %9, %10 : vector<4x8x8xf32>
    %c0_12 = arith.constant 0 : index
    %c0_13 = arith.constant 0 : index
    %c0_14 = arith.constant 0 : index
    %12 = vector.load %arg4[%c0_12, %c0_13, %c0_14] : memref<1x1x8xf32, #tpu.memory_space<vmem>>, vector<1x1x8xf32>
    %13 = vector.shape_cast %12 : vector<1x1x8xf32> to vector<1x8xf32>
    %cst_15 = arith.constant 0.000000e+00 : f32
    %14 = vector.broadcast %cst_15 : f32 to vector<1x8xf32>
    %15 = arith.cmpf one, %13, %14 : vector<1x8xf32>
    %16 = vector.shape_cast %15 : vector<1x8xi1> to vector<1x1x8xi1>
    %cst_16 = arith.constant -1.000000e+09 : f32
    %17 = vector.shape_cast %16 : vector<1x1x8xi1> to vector<1x1x8xi1>
    %18 = vector.broadcast %17 : vector<1x1x8xi1> to vector<4x8x8xi1>
    %19 = vector.broadcast %cst_16 : f32 to vector<4x8x8xf32>
    %20 = arith.select %18, %11, %19 : vector<4x8x8xi1>, vector<4x8x8xf32>
    %cst_17 = arith.constant dense<0xFF800000> : vector<4x8xf32>
    %21 = vector.multi_reduction <maximumf>, %20, %cst_17 [2] : vector<4x8x8xf32> to vector<4x8xf32>
    %22 = vector.shape_cast %21 : vector<4x8xf32> to vector<4x8x1xf32>
    %23 = vector.broadcast %22 : vector<4x8x1xf32> to vector<4x8x8xf32>
    %24 = arith.subf %20, %23 : vector<4x8x8xf32>
    %25 = math.exp %24 : vector<4x8x8xf32>
    %cst_18 = arith.constant dense<0.000000e+00> : vector<4x8xf32>
    %26 = vector.multi_reduction <add>, %25, %cst_18 [2] : vector<4x8x8xf32> to vector<4x8xf32>
    %27 = vector.shape_cast %26 : vector<4x8xf32> to vector<4x8x1xf32>
    %28 = tpu.reciprocal %27 {approx = true} : vector<4x8x1xf32> -> vector<4x8x1xf32>
    %29 = vector.broadcast %28 : vector<4x8x1xf32> to vector<4x8x8xf32>
    %30 = arith.mulf %25, %29 : vector<4x8x8xf32>
    %31 = arith.truncf %30 : vector<4x8x8xf32> to vector<4x8x8xbf16>
    "tpu.trace_start"() <{level = 10 : i32, message = "hqk,hkd->hqd"}> : () -> ()
    %cst_19 = arith.constant dense<0.000000e+00> : vector<4x8x8xf32>
    %32 = tpu.matmul %31, %8, %cst_19 {dimension_numbers = #tpu.dot_dimension_numbers<[2], [1], [1], [2], [0, 0, 0, 1, 1, 2], [0], [0]>} : vector<4x8x8xbf16>, vector<4x8x8xbf16>, vector<4x8x8xf32> -> vector<4x8x8xf32>
    "tpu.trace_stop"() : () -> ()
    %c0_20 = arith.constant 0 : index
    %c0_21 = arith.constant 0 : index
    %c0_22 = arith.constant 0 : index
    %c0_23 = arith.constant 0 : index
    %33 = vector.load %arg5[%c0_20, %c0_21, %c0_22, %c0_23] : memref<1x4x8x8xf32, #tpu.memory_space<vmem>>, vector<1x4x8x8xf32>
    %34 = vector.shape_cast %33 : vector<1x4x8x8xf32> to vector<4x8x8xf32>
    %35 = vector.shape_cast %32 : vector<4x8x8xf32> to vector<1x4x8x8xf32>
    tpu.vector_store %arg5[%c0_20, %c0_21, %c0_22, %c0_23], %35 {strides = array<i32>} : memref<1x4x8x8xf32, #tpu.memory_space<vmem>>, vector<1x4x8x8xf32>,
    return
  }
  func.func @transform_0(%arg0: i32) -> (i32, i32, i32, i32) {
    %c0_i32 = arith.constant 0 : i32
    %c0_i32_0 = arith.constant 0 : i32
    %c0_i32_1 = arith.constant 0 : i32
    %c0_i32_2 = arith.constant 0 : i32
    return %arg0, %c0_i32, %c0_i32_0, %c0_i32_1 : i32, i32, i32, i32
  }
  func.func @transform_1(%arg0: i32) -> (i32, i32, i32, i32) {
    %c0_i32 = arith.constant 0 : i32
    %c0_i32_0 = arith.constant 0 : i32
    %c0_i32_1 = arith.constant 0 : i32
    %c0_i32_2 = arith.constant 0 : i32
    return %arg0, %c0_i32, %c0_i32_0, %c0_i32_1 : i32, i32, i32, i32
  }
  func.func @transform_2(%arg0: i32) -> (i32, i32, i32, i32) {
    %c0_i32 = arith.constant 0 : i32
    %c0_i32_0 = arith.constant 0 : i32
    %c0_i32_1 = arith.constant 0 : i32
    %c0_i32_2 = arith.constant 0 : i32
    return %arg0, %c0_i32, %c0_i32_0, %c0_i32_1 : i32, i32, i32, i32
  }
  func.func @transform_3(%arg0: i32) -> (i32, i32, i32) {
    %c0_i32 = arith.constant 0 : i32
    %c0_i32_0 = arith.constant 0 : i32
    %c0_i32_1 = arith.constant 0 : i32
    return %arg0, %c0_i32, %c0_i32_0 : i32, i32, i32
  }
  func.func @transform_4(%arg0: i32) -> (i32, i32, i32, i32) {
    %c0_i32 = arith.constant 0 : i32
    %c0_i32_0 = arith.constant 0 : i32
    %c0_i32_1 = arith.constant 0 : i32
    %c0_i32_2 = arith.constant 0 : i32
    return %arg0, %c0_i32, %c0_i32_0, %c0_i32_1 : i32, i32, i32, i32
  }
}

module attributes {stable_mosaic.version = 11 : i64} {
  func.func @_linear_kernel(%arg0: i32, %arg1: i32, %arg2: memref<16x32xf32, #tpu.memory_space<vmem>>, %arg3: memref<32x64xbf16, #tpu.memory_space<vmem>>, %arg4: memref<1x64xf32, #tpu.memory_space<vmem>>, %arg5: memref<16x64xf32, #tpu.memory_space<vmem>>) attributes {dimension_semantics = [#tpu.dimension_semantics<parallel>, #tpu.dimension_semantics<parallel>], iteration_bounds = array<i64: 1, 1>, scalar_prefetch = 0 : i64, scratch_operands = 0 : i64, tpu.core_type = #tpu.core_type<tc>, window_params = [{transform_indices = @transform_0, window_bounds = array<i64: 16, 32>}, {transform_indices = @transform_1, window_bounds = array<i64: 32, 64>}, {transform_indices = @transform_2, window_bounds = array<i64: 1, 64>}, {transform_indices = @transform_3, window_bounds = array<i64: 16, 64>}]} {
    %c0 = arith.constant 0 : index
    %c0_0 = arith.constant 0 : index
    %0 = vector.load %arg2[%c0, %c0_0] : memref<16x32xf32, #tpu.memory_space<vmem>>, vector<16x32xf32>
    %1 = arith.truncf %0 : vector<16x32xf32> to vector<16x32xbf16>
    %c0_1 = arith.constant 0 : index
    %c0_2 = arith.constant 0 : index
    %2 = vector.load %arg3[%c0_1, %c0_2] : memref<32x64xbf16, #tpu.memory_space<vmem>>, vector<32x64xbf16>
    %cst = arith.constant dense<0.000000e+00> : vector<16x64xf32>
    %3 = tpu.matmul %1, %2, %cst {dimension_numbers = #tpu.dot_dimension_numbers<[1], [0], [0], [1], [0, 0, 1, 1], [], []>} : vector<16x32xbf16>, vector<32x64xbf16>, vector<16x64xf32> -> vector<16x64xf32>
    %c0_3 = arith.constant 0 : index
    %c0_4 = arith.constant 0 : index
    %4 = vector.load %arg4[%c0_3, %c0_4] : memref<1x64xf32, #tpu.memory_space<vmem>>, vector<1x64xf32>
    %5 = vector.broadcast %4 : vector<1x64xf32> to vector<16x64xf32>
    %6 = arith.addf %3, %5 : vector<16x64xf32>
    %c0_5 = arith.constant 0 : index
    %c0_6 = arith.constant 0 : index
    %7 = vector.load %arg5[%c0_5, %c0_6] : memref<16x64xf32, #tpu.memory_space<vmem>>, vector<16x64xf32>
    tpu.vector_store %arg5[%c0_5, %c0_6], %6 {strides = array<i32>} : memref<16x64xf32, #tpu.memory_space<vmem>>, vector<16x64xf32>,
    return
  }
  func.func @transform_0(%arg0: i32, %arg1: i32) -> (i32, i32) {
    %c0_i32 = arith.constant 0 : i32
    %c0_i32_0 = arith.constant 0 : i32
    return %arg0, %c0_i32 : i32, i32
  }
  func.func @transform_1(%arg0: i32, %arg1: i32) -> (i32, i32) {
    %c0_i32 = arith.constant 0 : i32
    %c0_i32_0 = arith.constant 0 : i32
    return %c0_i32, %arg1 : i32, i32
  }
  func.func @transform_2(%arg0: i32, %arg1: i32) -> (i32, i32) {
    %c0_i32 = arith.constant 0 : i32
    %c0_i32_0 = arith.constant 0 : i32
    return %c0_i32, %arg1 : i32, i32
  }
  func.func @transform_3(%arg0: i32, %arg1: i32) -> (i32, i32) {
    %c0_i32 = arith.constant 0 : i32
    return %arg0, %arg1 : i32, i32
  }
}

module attributes {stable_mosaic.version = 11 : i64} {
  func.func @_linear_kernel(%arg0: i32, %arg1: i32, %arg2: memref<16x32xf32, #tpu.memory_space<vmem>>, %arg3: memref<32x50xbf16, #tpu.memory_space<vmem>>, %arg4: memref<1x50xf32, #tpu.memory_space<vmem>>, %arg5: memref<16x50xf32, #tpu.memory_space<vmem>>) attributes {dimension_semantics = [#tpu.dimension_semantics<parallel>, #tpu.dimension_semantics<parallel>], iteration_bounds = array<i64: 1, 1>, scalar_prefetch = 0 : i64, scratch_operands = 0 : i64, tpu.core_type = #tpu.core_type<tc>, window_params = [{transform_indices = @transform_0, window_bounds = array<i64: 16, 32>}, {transform_indices = @transform_1, window_bounds = array<i64: 32, 50>}, {transform_indices = @transform_2, window_bounds = array<i64: 1, 50>}, {transform_indices = @transform_3, window_bounds = array<i64: 16, 50>}]} {
    %c0 = arith.constant 0 : index
    %c0_0 = arith.constant 0 : index
    %0 = vector.load %arg2[%c0, %c0_0] : memref<16x32xf32, #tpu.memory_space<vmem>>, vector<16x32xf32>
    %1 = arith.truncf %0 : vector<16x32xf32> to vector<16x32xbf16>
    %c0_1 = arith.constant 0 : index
    %c0_2 = arith.constant 0 : index
    %2 = vector.load %arg3[%c0_1, %c0_2] : memref<32x50xbf16, #tpu.memory_space<vmem>>, vector<32x50xbf16>
    %cst = arith.constant dense<0.000000e+00> : vector<16x50xf32>
    %3 = tpu.matmul %1, %2, %cst {dimension_numbers = #tpu.dot_dimension_numbers<[1], [0], [0], [1], [0, 0, 1, 1], [], []>} : vector<16x32xbf16>, vector<32x50xbf16>, vector<16x50xf32> -> vector<16x50xf32>
    %c0_3 = arith.constant 0 : index
    %c0_4 = arith.constant 0 : index
    %4 = vector.load %arg4[%c0_3, %c0_4] : memref<1x50xf32, #tpu.memory_space<vmem>>, vector<1x50xf32>
    %5 = vector.broadcast %4 : vector<1x50xf32> to vector<16x50xf32>
    %6 = arith.addf %3, %5 : vector<16x50xf32>
    %c0_5 = arith.constant 0 : index
    %c0_6 = arith.constant 0 : index
    %7 = vector.load %arg5[%c0_5, %c0_6] : memref<16x50xf32, #tpu.memory_space<vmem>>, vector<16x50xf32>
    tpu.vector_store %arg5[%c0_5, %c0_6], %6 {strides = array<i32>} : memref<16x50xf32, #tpu.memory_space<vmem>>, vector<16x50xf32>,
    return
  }
  func.func @transform_0(%arg0: i32, %arg1: i32) -> (i32, i32) {
    %c0_i32 = arith.constant 0 : i32
    %c0_i32_0 = arith.constant 0 : i32
    return %arg0, %c0_i32 : i32, i32
  }
  func.func @transform_1(%arg0: i32, %arg1: i32) -> (i32, i32) {
    %c0_i32 = arith.constant 0 : i32
    %c0_i32_0 = arith.constant 0 : i32
    return %c0_i32, %arg1 : i32, i32
  }
  func.func @transform_2(%arg0: i32, %arg1: i32) -> (i32, i32) {
    %c0_i32 = arith.constant 0 : i32
    %c0_i32_0 = arith.constant 0 : i32
    return %c0_i32, %arg1 : i32, i32
  }
  func.func @transform_3(%arg0: i32, %arg1: i32) -> (i32, i32) {
    %c0_i32 = arith.constant 0 : i32
    return %arg0, %arg1 : i32, i32
  }
}

</mosaic_0001>

<llo_original>
// kernel: _lambda_.47
$region0: #{_lambda_.47}
  #allocation0 [shape = 'u32[]', space=smem, size = 0x4, offset = 0x4, fixed_abs, tag = 'smem constant byte address 0x4 - core index']
  #allocation1 [shape = 'u32[144,128]{1,0:T(1,128)}', space=vmem, size = 0x12000, scoped, tag = 'internal scratch']
  %s0 = inlined_call_operand.vmem [shape: f32[16,32], index: 0, kind: input, shape index: {}]
  %s1 = inlined_call_operand.vmem [shape: bf16[32,96], index: 1, kind: input, shape index: {}]
  %s2 = inlined_call_operand.vmem [shape: f32[1,96], index: 2, kind: input, shape index: {}]
  %s3 = inlined_call_operand.vmem [shape: f32[16,96], index: 3, kind: output, shape index: {}]
  %s4 = sld [smem:[#allocation0]]
  $region22: #{_lambda_.47} parent=0
    _
  %s6 = ssub.s32 1, %s4
  %s7 = scalar_select 0, %s6, %s4
  // Predicated region
  $region2: #{_lambda_.47} parent=0 // pred_check
    _
  $region3: #{_lambda_.47} parent=0 // pred_check_branch
    %9 = sbr.rel (0) target = $region5
  $region4: #{_lambda_.47} parent=0 // pred_region
    _
  $region5: #{_lambda_.47} parent=0 // pred_fallthru
    _
  // Predicated region
  $region6: #{_lambda_.47} parent=0 // pred_check
    _
  $region7: #{_lambda_.47} parent=0 // pred_check_branch
    %11 = sbr.rel (0) target = $region9
  $region8: #{_lambda_.47} parent=0 // pred_region
    _
  $region9: #{_lambda_.47} parent=0 // pred_fallthru
    _
  // Predicated region
  $region10: #{_lambda_.47} parent=0 // pred_check
    _
  $region11: #{_lambda_.47} parent=0 // pred_check_branch
    %13 = sbr.rel (0) target = $region13
  $region12: #{_lambda_.47} parent=0 // pred_region
    _
  $region13: #{_lambda_.47} parent=0 // pred_fallthru
    _
  %v15 = vld [vmem:[%s0] sm:$0xff]
  %v16 = vld [vmem:[%s0 + $0x8] sm:$0xff]
  %v17 = vpack.c.bf16 %v16, %v15
  %v18 = vld [vmem:[%s1] sm:$0xf]
  %v19 = vld [vmem:[%s1 + $0x4] sm:$0xf]
  %v20 = vld [vmem:[%s1 + $0x8] sm:$0xf]
  %v21 = vld [vmem:[%s1 + $0xc] sm:$0xf]
  %v22 = vld [vmem:[%s2] sm:$0x1]
  %v24 = vlaneseq
  %v25 = vshrl.u32 %v24, 7
  %v26 = vsub.s32 0, %v25
  %v27 = vrot.slane %v22, %v26
  %v33 = vunpack.c.l.b16 %v18
  %v34 = vunpack.c.l.b16 %v19
  %v35 = vunpack.c.l.b16 %v20
  %v36 = vunpack.c.l.b16 %v21
  %v37 = vpack.c.b16 %v34, %v33
  %v38 = vpack.c.b16 %v36, %v35
  %vm41 = vcmask 261120
  %v43 = vsel %vm41, %v17, 0
  %45 = vmatprep.subr.bf16.mxu0 0
  %46 = vmatpush1.bf16.msra.mxu0 %v37
  %47 = vmatprep.subr.bf16.mxu0 0
  %48 = vmatpush1.bf16.msra.mxu0 %v38
  %49 = vmatprep.subr.bf16.mxu0 0
  %50 = vmatpush1.bf16.msra.mxu0 0
  %51 = vmatprep.subr.bf16.mxu0 0
  %52 = vmatpush1.bf16.msra.mxu0 0
  %53 = vmatprep.subr.bf16.mxu0 0
  %54 = vmatpush1.bf16.msra.mxu0 0
  %55 = vmatprep.subr.bf16.mxu0 0
  %56 = vmatpush1.bf16.msra.mxu0 0
  %57 = vmatprep.subr.bf16.mxu0 0
  %58 = vmatpush1.bf16.msra.mxu0 0
  %59 = vmatprep.subr.bf16.mxu0 0
  %60 = vmatpush1.bf16.msra.mxu0 0
  %61 = vmatprep.subr.bf16.mxu0 0
  %62 = vmatpush1.bf16.msra.mxu0 0
  %63 = vmatprep.subr.bf16.mxu0 0
  %64 = vmatpush1.bf16.msra.mxu0 0
  %65 = vmatprep.subr.bf16.mxu0 0
  %66 = vmatpush1.bf16.msra.mxu0 0
  %67 = vmatprep.subr.bf16.mxu0 0
  %68 = vmatpush1.bf16.msra.mxu0 0
  %69 = vmatprep.subr.bf16.mxu0 0
  %70 = vmatpush1.bf16.msra.mxu0 0
  %71 = vmatprep.subr.bf16.mxu0 0
  %72 = vmatpush1.bf16.msra.mxu0 0
  %73 = vmatprep.subr.bf16.mxu0 0
  %74 = vmatpush1.bf16.msra.mxu0 0
  %75 = vmatprep.subr.bf16.mxu0 0
  %76 = vmatpush1.bf16.msra.mxu0 0
  %77 = vmatprep.mubr.bf16.mxu0 0
  %78 = vmatmul.mubr.bf16.gmra.mrb[0].mxu0 %v43
  %v79 = vpop.f32.mrb[0].mxu0
  %v80 = vadd.f32 %v27, %v79
  %v81 = vpop.f32.mrb[0].mxu0
  %v82 = vpop.f32.mrb[0].mxu0
  %v83 = vadd.f32 %v27, %v82
  %v84 = vpop.f32.mrb[0].mxu0
  %85 = vdwg.mxu0
  %vm86 = vcmask 785408
  %87 = vst.msk [vmem:[%s3] sm:$0xff] %vm86, %v80
  %88 = vst.msk [vmem:[%s3 + $0x8] sm:$0xff] %vm86, %v83
  // Predicated region
  $region14: #{_lambda_.47} parent=0 // pred_check
    _
  $region15: #{_lambda_.47} parent=0 // pred_check_branch
    %90 = sbr.rel (0) target = $region17
  $region16: #{_lambda_.47} parent=0 // pred_region
    _
  $region17: #{_lambda_.47} parent=0 // pred_fallthru
    _
  // Predicated region
  $region18: #{_lambda_.47} parent=0 // pred_check
    _
  $region19: #{_lambda_.47} parent=0 // pred_check_branch
    %92 = sbr.rel (0) target = $region21
  $region20: #{_lambda_.47} parent=0 // pred_region
    _
  $region21: #{_lambda_.47} parent=0 // pred_fallthru
    _

// kernel: _lambda_.50
$region0: #{_lambda_.50}
  #allocation0 [shape = 'u32[]', space=smem, size = 0x4, offset = 0x4, fixed_abs, tag = 'smem constant byte address 0x4 - core index']
  #allocation1 [shape = 'u32[144,128]{1,0:T(1,128)}', space=vmem, size = 0x12000, scoped, tag = 'internal scratch']
  %s0 = inlined_call_operand.vmem [shape: f32[16,32], index: 0, kind: input, shape index: {}]
  %s1 = inlined_call_operand.vmem [shape: f32[16,32], index: 1, kind: input, shape index: {}]
  %s2 = inlined_call_operand.vmem [shape: f32[1,32], index: 2, kind: input, shape index: {}]
  %s3 = inlined_call_operand.vmem [shape: f32[1,32], index: 3, kind: input, shape index: {}]
  %s4 = inlined_call_operand.vmem [shape: f32[16,32], index: 4, kind: output, shape index: {}]
  %s5 = sld [smem:[#allocation0]]
  $region26: #{_lambda_.50} parent=0
    _
  %s7 = ssub.s32 1, %s5
  %s8 = scalar_select 0, %s7, %s5
  // Predicated region
  $region2: #{_lambda_.50} parent=0 // pred_check
    _
  $region3: #{_lambda_.50} parent=0 // pred_check_branch
    %10 = sbr.rel (0) target = $region5
  $region4: #{_lambda_.50} parent=0 // pred_region
    _
  $region5: #{_lambda_.50} parent=0 // pred_fallthru
    _
  // Predicated region
  $region6: #{_lambda_.50} parent=0 // pred_check
    _
  $region7: #{_lambda_.50} parent=0 // pred_check_branch
    %12 = sbr.rel (0) target = $region9
  $region8: #{_lambda_.50} parent=0 // pred_region
    _
  $region9: #{_lambda_.50} parent=0 // pred_fallthru
    _
  // Predicated region
  $region10: #{_lambda_.50} parent=0 // pred_check
    _
  $region11: #{_lambda_.50} parent=0 // pred_check_branch
    %14 = sbr.rel (0) target = $region13
  $region12: #{_lambda_.50} parent=0 // pred_region
    _
  $region13: #{_lambda_.50} parent=0 // pred_fallthru
    _
  // Predicated region
  $region14: #{_lambda_.50} parent=0 // pred_check
    _
  $region15: #{_lambda_.50} parent=0 // pred_check_branch
    %16 = sbr.rel (0) target = $region17
  $region16: #{_lambda_.50} parent=0 // pred_region
    _
  $region17: #{_lambda_.50} parent=0 // pred_fallthru
    _
  %v17 = vld [vmem:[%s0] sm:$0xff]
  %v18 = vld [vmem:[%s0 + $0x8] sm:$0xff]
  %v19 = vld [vmem:[%s1] sm:$0xff]
  %v20 = vld [vmem:[%s1 + $0x8] sm:$0xff]
  %v21 = vadd.f32 %v17, %v19
  %v22 = vadd.f32 %v18, %v20
  %vm23 = vcmask 261120
  %v24 = vsel %vm23, %v21, 0.0
  %25 = vadd.xlane.f32.xlu0 %v24
  %v26 = vpop.xlane.xlu0 %25
  %v27 = vsel %vm23, %v22, 0.0
  %28 = vadd.xlane.f32.xlu0 %v27
  %v29 = vpop.xlane.xlu0 %28
  %v30 = vrcp.pop 32.0
  %v31 = vmul.f32 %v26, %v30
  %v32 = vmul.f32 %v29, %v30
  %v33 = vsub.f32 %v21, %v31
  %v34 = vsub.f32 %v22, %v32
  %v35 = vmul.f32 %v33, %v33
  %v36 = vmul.f32 %v34, %v34
  %v37 = vsel %vm23, %v35, 0.0
  %38 = vadd.xlane.f32.xlu0 %v37
  %v39 = vpop.xlane.xlu0 %38
  %v40 = vsel %vm23, %v36, 0.0
  %41 = vadd.xlane.f32.xlu0 %v40
  %v42 = vpop.xlane.xlu0 %41
  %v43 = vmul.f32 %v39, %v30
  %v44 = vmul.f32 %v42, %v30
  %v45 = vadd.f32 %v43, 1e-05
  %v46 = vadd.f32 %v44, 1e-05
  %v47 = vrsqrt.pop %v45
  %v48 = vrsqrt.pop %v46
  %v49 = vmul.f32 %v33, %v47
  %v50 = vmul.f32 %v34, %v48
  %v51 = vld [vmem:[%s2] sm:$0x1]
  %v53 = vlaneseq
  %v54 = vshrl.u32 %v53, 7
  %v55 = vsub.s32 0, %v54
  %v56 = vrot.slane %v51, %v55
  %v58 = vmul.f32 %v49, %v56
  %v59 = vmul.f32 %v50, %v56
  %v60 = vld [vmem:[%s3] sm:$0x1]
  %v62 = vlaneseq
  %v63 = vshrl.u32 %v62, 7
  %v64 = vsub.s32 0, %v63
  %v65 = vrot.slane %v60, %v64
  %v67 = vadd.f32 %v58, %v65
  %v68 = vadd.f32 %v59, %v65
  %69 = vst.msk [vmem:[%s4] sm:$0xff] %vm23, %v67
  %70 = vst.msk [vmem:[%s4 + $0x8] sm:$0xff] %vm23, %v68
  // Predicated region
  $region18: #{_lambda_.50} parent=0 // pred_check
    _
  $region19: #{_lambda_.50} parent=0 // pred_check_branch
    %72 = sbr.rel (0) target = $region21
  $region20: #{_lambda_.50} parent=0 // pred_region
    _
  $region21: #{_lambda_.50} parent=0 // pred_fallthru
    _
  // Predicated region
  $region22: #{_lambda_.50} parent=0 // pred_check
    _
  $region23: #{_lambda_.50} parent=0 // pred_check_branch
    %74 = sbr.rel (0) target = $region25
  $region24: #{_lambda_.50} parent=0 // pred_region
    _
  $region25: #{_lambda_.50} parent=0 // pred_fallthru
    _

// kernel: _lambda_.49
$region0: #{_lambda_.49}
  #allocation0 [shape = 'u32[]', space=smem, size = 0x4, offset = 0x4, fixed_abs, tag = 'smem constant byte address 0x4 - core index']
  #allocation1 [shape = 'u32[144,128]{1,0:T(1,128)}', space=vmem, size = 0x12000, scoped, tag = 'internal scratch']
  %s0 = inlined_call_operand.vmem [shape: f32[16,32], index: 0, kind: input, shape index: {}]
  %s1 = inlined_call_operand.vmem [shape: bf16[32,32], index: 1, kind: input, shape index: {}]
  %s2 = inlined_call_operand.vmem [shape: f32[1,32], index: 2, kind: input, shape index: {}]
  %s3 = inlined_call_operand.vmem [shape: f32[16,32], index: 3, kind: output, shape index: {}]
  %s4 = sld [smem:[#allocation0]]
  $region22: #{_lambda_.49} parent=0
    _
  %s6 = ssub.s32 1, %s4
  %s7 = scalar_select 0, %s6, %s4
  // Predicated region
  $region2: #{_lambda_.49} parent=0 // pred_check
    _
  $region3: #{_lambda_.49} parent=0 // pred_check_branch
    %9 = sbr.rel (0) target = $region5
  $region4: #{_lambda_.49} parent=0 // pred_region
    _
  $region5: #{_lambda_.49} parent=0 // pred_fallthru
    _
  // Predicated region
  $region6: #{_lambda_.49} parent=0 // pred_check
    _
  $region7: #{_lambda_.49} parent=0 // pred_check_branch
    %11 = sbr.rel (0) target = $region9
  $region8: #{_lambda_.49} parent=0 // pred_region
    _
  $region9: #{_lambda_.49} parent=0 // pred_fallthru
    _
  // Predicated region
  $region10: #{_lambda_.49} parent=0 // pred_check
    _
  $region11: #{_lambda_.49} parent=0 // pred_check_branch
    %13 = sbr.rel (0) target = $region13
  $region12: #{_lambda_.49} parent=0 // pred_region
    _
  $region13: #{_lambda_.49} parent=0 // pred_fallthru
    _
  %v15 = vld [vmem:[%s0] sm:$0xff]
  %v16 = vld [vmem:[%s0 + $0x8] sm:$0xff]
  %v17 = vpack.c.bf16 %v16, %v15
  %v18 = vld [vmem:[%s1] sm:$0xf]
  %v19 = vld [vmem:[%s1 + $0x4] sm:$0xf]
  %v20 = vld [vmem:[%s1 + $0x8] sm:$0xf]
  %v21 = vld [vmem:[%s1 + $0xc] sm:$0xf]
  %v22 = vld [vmem:[%s2] sm:$0x1]
  %v24 = vlaneseq
  %v25 = vshrl.u32 %v24, 7
  %v26 = vsub.s32 0, %v25
  %v27 = vrot.slane %v22, %v26
  %v33 = vunpack.c.l.b16 %v18
  %v34 = vunpack.c.l.b16 %v19
  %v35 = vunpack.c.l.b16 %v20
  %v36 = vunpack.c.l.b16 %v21
  %v37 = vpack.c.b16 %v34, %v33
  %v38 = vpack.c.b16 %v36, %v35
  %vm41 = vcmask 261120
  %v43 = vsel %vm41, %v17, 0
  %45 = vmatprep.subr.bf16.mxu0 0
  %46 = vmatpush1.bf16.msra.mxu0 %v37
  %47 = vmatprep.subr.bf16.mxu0 0
  %48 = vmatpush1.bf16.msra.mxu0 %v38
  %49 = vmatprep.subr.bf16.mxu0 0
  %50 = vmatpush1.bf16.msra.mxu0 0
  %51 = vmatprep.subr.bf16.mxu0 0
  %52 = vmatpush1.bf16.msra.mxu0 0
  %53 = vmatprep.subr.bf16.mxu0 0
  %54 = vmatpush1.bf16.msra.mxu0 0
  %55 = vmatprep.subr.bf16.mxu0 0
  %56 = vmatpush1.bf16.msra.mxu0 0
  %57 = vmatprep.subr.bf16.mxu0 0
  %58 = vmatpush1.bf16.msra.mxu0 0
  %59 = vmatprep.subr.bf16.mxu0 0
  %60 = vmatpush1.bf16.msra.mxu0 0
  %61 = vmatprep.subr.bf16.mxu0 0
  %62 = vmatpush1.bf16.msra.mxu0 0
  %63 = vmatprep.subr.bf16.mxu0 0
  %64 = vmatpush1.bf16.msra.mxu0 0
  %65 = vmatprep.subr.bf16.mxu0 0
  %66 = vmatpush1.bf16.msra.mxu0 0
  %67 = vmatprep.subr.bf16.mxu0 0
  %68 = vmatpush1.bf16.msra.mxu0 0
  %69 = vmatprep.subr.bf16.mxu0 0
  %70 = vmatpush1.bf16.msra.mxu0 0
  %71 = vmatprep.subr.bf16.mxu0 0
  %72 = vmatpush1.bf16.msra.mxu0 0
  %73 = vmatprep.subr.bf16.mxu0 0
  %74 = vmatpush1.bf16.msra.mxu0 0
  %75 = vmatprep.subr.bf16.mxu0 0
  %76 = vmatpush1.bf16.msra.mxu0 0
  %77 = vmatprep.mubr.bf16.mxu0 0
  %78 = vmatmul.mubr.bf16.gmra.mrb[0].mxu0 %v43
  %v79 = vpop.f32.mrb[0].mxu0
  %v80 = vadd.f32 %v27, %v79
  %v81 = vpop.f32.mrb[0].mxu0
  %v82 = vpop.f32.mrb[0].mxu0
  %v83 = vadd.f32 %v27, %v82
  %v84 = vpop.f32.mrb[0].mxu0
  %85 = vdwg.mxu0
  %86 = vst.msk [vmem:[%s3] sm:$0xff] %vm41, %v80
  %87 = vst.msk [vmem:[%s3 + $0x8] sm:$0xff] %vm41, %v83
  // Predicated region
  $region14: #{_lambda_.49} parent=0 // pred_check
    _
  $region15: #{_lambda_.49} parent=0 // pred_check_branch
    %89 = sbr.rel (0) target = $region17
  $region16: #{_lambda_.49} parent=0 // pred_region
    _
  $region17: #{_lambda_.49} parent=0 // pred_fallthru
    _
  // Predicated region
  $region18: #{_lambda_.49} parent=0 // pred_check
    _
  $region19: #{_lambda_.49} parent=0 // pred_check_branch
    %91 = sbr.rel (0) target = $region21
  $region20: #{_lambda_.49} parent=0 // pred_region
    _
  $region21: #{_lambda_.49} parent=0 // pred_fallthru
    _

// kernel: _lambda_.48
$region0: #{_lambda_.48}
  #allocation0 [shape = 'u32[]', space=smem, size = 0x4, offset = 0x4, fixed_abs, tag = 'smem constant byte address 0x4 - core index']
  #allocation1 [shape = 'u32[144,128]{1,0:T(1,128)}', space=vmem, size = 0x12000, scoped, tag = 'internal scratch']
  %s0 = inlined_call_operand.vmem [shape: f32[2,4,8,8], index: 0, kind: input, shape index: {}]
  %s1 = inlined_call_operand.vmem [shape: f32[2,4,8,8], index: 1, kind: input, shape index: {}]
  %s2 = inlined_call_operand.vmem [shape: f32[2,4,8,8], index: 2, kind: input, shape index: {}]
  %s3 = inlined_call_operand.vmem [shape: f32[2,8,1], index: 3, kind: input, shape index: {}]
  %s4 = inlined_call_operand.vmem [shape: f32[2,4,8,8], index: 4, kind: output, shape index: {}]
  %s5 = sld [smem:[#allocation0]]
  $region49: #{_lambda_.48} parent=0
    _
  %s7 = ssub.s32 1, %s5
  %s8 = scalar_select 0, %s7, %s5
  loop: start=0, step=1, limit=4
  $region2: #{_lambda_.48} parent=0 // loop_pre_header
    _
  $region3: #{_lambda_.48} parent=0 // loop_header
    %s10 = sphi 0, %s14
    %p11 = scmp.ge.s32.totalorder %s10, 4
    %s20 = sphi 0, %s22
    %s23 = sphi 0, %s20
    %s24 = sphi 0, %s23
    %s40 = sphi 0, %s24
    %s46 = sphi 0, %s48
    %s49 = sphi 0, %s46
    %s50 = sphi 0, %s49
    %s66 = sphi 0, %s50
    %s72 = sphi 0, %s74
    %s75 = sphi 0, %s72
    %s76 = sphi 0, %s75
    %s92 = sphi 0, %s76
    %s98 = sphi 0, %s100
    %s101 = sphi 0, %s98
    %s102 = sphi 0, %s101
    %s118 = sphi 0, %s102
    %s124 = sphi 0, %s126
    %s127 = sphi 0, %s124
    %s128 = sphi 0, %s127
    %s144 = sphi 0, %s128
  $region4: #{_lambda_.48} parent=0 // loop_header_branch
    %13 = sbr.rel (%p11) target = $region8
  $region5: #{_lambda_.48} parent=0 // loop_body
    %s15 = ssub.s32 %s10, 1
    %s16 = ssub.s32 %s10, 2
    %s17 = sadd.s32 %s10, 1
    %s18 = ssub.s32 %s10, %s17
    %p19 = scmp.eq.s32.totalorder %s18, 0
    %s21 = sadd.s32 %s20, 1
    %s22 = scalar_select %p19, %s20, %s21
    %p25 = pneg %p19
    %p26 = scmp.eq.s32.totalorder %s10, 1
    %p27 = por %p25, %p26
    %p28 = scmp.ne.s32.totalorder %s20, %s23
    %p29 = scmp.eq.s32.totalorder %s10, 0
    %p30 = por %p28, %p29
    %p31 = scmp.ne.s32.totalorder %s20, %s23
    %p32 = scmp.eq.s32.totalorder %s15, 1
    %p33 = por %p31, %p32
    %p34 = scmp.ne.s32.totalorder %s23, %s24
    %p35 = scmp.eq.s32.totalorder %s15, 0
    %p36 = por %p34, %p35
    %p37 = scmp.ne.s32.totalorder %s23, %s24
    %p38 = scmp.eq.s32.totalorder %s16, 1
    %p39 = por %p37, %p38
    %p41 = scmp.ne.s32.totalorder %s24, %s40
    %p42 = scmp.eq.s32.totalorder %s16, 0
    %p43 = por %p41, %p42
    %s44 = ssub.s32 %s10, %s17
    %p45 = scmp.eq.s32.totalorder %s44, 0
    %s47 = sadd.s32 %s46, 1
    %s48 = scalar_select %p45, %s46, %s47
    %p51 = pneg %p45
    %p52 = scmp.eq.s32.totalorder %s10, 1
    %p53 = por %p51, %p52
    %p54 = scmp.ne.s32.totalorder %s46, %s49
    %p55 = scmp.eq.s32.totalorder %s10, 0
    %p56 = por %p54, %p55
    %p57 = scmp.ne.s32.totalorder %s46, %s49
    %p58 = scmp.eq.s32.totalorder %s15, 1
    %p59 = por %p57, %p58
    %p60 = scmp.ne.s32.totalorder %s49, %s50
    %p61 = scmp.eq.s32.totalorder %s15, 0
    %p62 = por %p60, %p61
    %p63 = scmp.ne.s32.totalorder %s49, %s50
    %p64 = scmp.eq.s32.totalorder %s16, 1
    %p65 = por %p63, %p64
    %p67 = scmp.ne.s32.totalorder %s50, %s66
    %p68 = scmp.eq.s32.totalorder %s16, 0
    %p69 = por %p67, %p68
    %s70 = ssub.s32 %s10, %s17
    %p71 = scmp.eq.s32.totalorder %s70, 0
    %s73 = sadd.s32 %s72, 1
    %s74 = scalar_select %p71, %s72, %s73
    %p77 = pneg %p71
    %p78 = scmp.eq.s32.totalorder %s10, 1
    %p79 = por %p77, %p78
    %p80 = scmp.ne.s32.totalorder %s72, %s75
    %p81 = scmp.eq.s32.totalorder %s10, 0
    %p82 = por %p80, %p81
    %p83 = scmp.ne.s32.totalorder %s72, %s75
    %p84 = scmp.eq.s32.totalorder %s15, 1
    %p85 = por %p83, %p84
    %p86 = scmp.ne.s32.totalorder %s75, %s76
    %p87 = scmp.eq.s32.totalorder %s15, 0
    %p88 = por %p86, %p87
    %p89 = scmp.ne.s32.totalorder %s75, %s76
    %p90 = scmp.eq.s32.totalorder %s16, 1
    %p91 = por %p89, %p90
    %p93 = scmp.ne.s32.totalorder %s76, %s92
    %p94 = scmp.eq.s32.totalorder %s16, 0
    %p95 = por %p93, %p94
    %s96 = ssub.s32 %s10, %s17
    %p97 = scmp.eq.s32.totalorder %s96, 0
    %s99 = sadd.s32 %s98, 1
    %s100 = scalar_select %p97, %s98, %s99
    %p103 = pneg %p97
    %p104 = scmp.eq.s32.totalorder %s10, 1
    %p105 = por %p103, %p104
    %p106 = scmp.ne.s32.totalorder %s98, %s101
    %p107 = scmp.eq.s32.totalorder %s10, 0
    %p108 = por %p106, %p107
    %p109 = scmp.ne.s32.totalorder %s98, %s101
    %p110 = scmp.eq.s32.totalorder %s15, 1
    %p111 = por %p109, %p110
    %p112 = scmp.ne.s32.totalorder %s101, %s102
    %p113 = scmp.eq.s32.totalorder %s15, 0
    %p114 = por %p112, %p113
    %p115 = scmp.ne.s32.totalorder %s101, %s102
    %p116 = scmp.eq.s32.totalorder %s16, 1
    %p117 = por %p115, %p116
    %p119 = scmp.ne.s32.totalorder %s102, %s118
    %p120 = scmp.eq.s32.totalorder %s16, 0
    %p121 = por %p119, %p120
    %s122 = ssub.s32 %s10, %s17
    %p123 = scmp.eq.s32.totalorder %s122, 0
    %s125 = sadd.s32 %s124, 1
    %s126 = scalar_select %p123, %s124, %s125
    %p129 = pneg %p123
    %p130 = scmp.eq.s32.totalorder %s10, 1
    %p131 = por %p129, %p130
    %p132 = scmp.ne.s32.totalorder %s124, %s127
    %p133 = scmp.eq.s32.totalorder %s10, 0
    %p134 = por %p132, %p133
    %p135 = scmp.ne.s32.totalorder %s124, %s127
    %p136 = scmp.eq.s32.totalorder %s15, 1
    %p137 = por %p135, %p136
    %p138 = scmp.ne.s32.totalorder %s127, %s128
    %p139 = scmp.eq.s32.totalorder %s15, 0
    %p140 = por %p138, %p139
    %p141 = scmp.ne.s32.totalorder %s127, %s128
    %p142 = scmp.eq.s32.totalorder %s16, 1
    %p143 = por %p141, %p142
    %p145 = scmp.ne.s32.totalorder %s128, %s144
    %p146 = scmp.eq.s32.totalorder %s16, 0
    %p147 = por %p145, %p146
    %p148 = scmp.le.s32.totalorder 1, %s10
    %p149 = scmp.lt.s32.totalorder %s10, 3
    %p150 = pnand %p148, %p149
    %p151 = pneg %p150
    // Predicated region
    $region9: #{_lambda_.48} parent=5 // pred_check
      _
    $region10: #{_lambda_.48} parent=5 // pred_check_branch
      %153 = sbr.rel (%p150) target = $region12
    $region11: #{_lambda_.48} parent=5 // pred_region
      %s154 = ssub.s32 %s10, 1
    $region12: #{_lambda_.48} parent=5 // pred_fallthru
      _
    %p155 = scmp.lt.s32.totalorder %s10, 2
    // Predicated region
    $region13: #{_lambda_.48} parent=5 // pred_check
      %p156 = pneg %p155
    $region14: #{_lambda_.48} parent=5 // pred_check_branch
      %158 = sbr.rel (%p156) target = $region16
    $region15: #{_lambda_.48} parent=5 // pred_region
      // Predicated region
      $region17: #{_lambda_.48} parent=15 // pred_check
        %p159 = pneg %p30
      $region18: #{_lambda_.48} parent=15 // pred_check_branch
        %161 = sbr.rel (%p159) target = $region20
      $region19: #{_lambda_.48} parent=15 // pred_region
        %p162 = scmp.lt.s32.totalorder %s10, 1
        %s163 = scalar_select %p162, %s10, 1
        %s164 = smul.addr %s163, 4
        %s165 = smul.addr %s164, 8
        %s166 = scalar_lea.vmem %s0, %s165
      $region20: #{_lambda_.48} parent=15 // pred_fallthru
        _
      // Predicated region
      $region21: #{_lambda_.48} parent=15 // pred_check
        %p167 = pneg %p56
      $region22: #{_lambda_.48} parent=15 // pred_check_branch
        %169 = sbr.rel (%p167) target = $region24
      $region23: #{_lambda_.48} parent=15 // pred_region
        %p170 = scmp.lt.s32.totalorder %s10, 1
        %s171 = scalar_select %p170, %s10, 1
        %s172 = smul.addr %s171, 4
        %s173 = smul.addr %s172, 8
        %s174 = scalar_lea.vmem %s1, %s173
      $region24: #{_lambda_.48} parent=15 // pred_fallthru
        _
      // Predicated region
      $region25: #{_lambda_.48} parent=15 // pred_check
        %p175 = pneg %p82
      $region26: #{_lambda_.48} parent=15 // pred_check_branch
        %177 = sbr.rel (%p175) target = $region28
      $region27: #{_lambda_.48} parent=15 // pred_region
        %p178 = scmp.lt.s32.totalorder %s10, 1
        %s179 = scalar_select %p178, %s10, 1
        %s180 = smul.addr %s179, 4
        %s181 = smul.addr %s180, 8
        %s182 = scalar_lea.vmem %s2, %s181
      $region28: #{_lambda_.48} parent=15 // pred_fallthru
        _
      // Predicated region
      $region29: #{_lambda_.48} parent=15 // pred_check
        %p183 = pneg %p108
      $region30: #{_lambda_.48} parent=15 // pred_check_branch
        %185 = sbr.rel (%p183) target = $region32
      $region31: #{_lambda_.48} parent=15 // pred_region
        %p186 = scmp.lt.s32.totalorder %s10, 1
        %s187 = scalar_select %p186, %s10, 1
        %s188 = smul.addr %s187, 8
        %s189 = scalar_lea.vmem %s3, %s188
      $region32: #{_lambda_.48} parent=15 // pred_fallthru
        _
    $region16: #{_lambda_.48} parent=5 // pred_fallthru
      _
    %p190 = scmp.le.s32.totalorder 1, %s10
    %p191 = scmp.lt.s32.totalorder %s10, 3
    %p192 = pnand %p190, %p191
    %p193 = pneg %p192
    // Predicated region
    $region33: #{_lambda_.48} parent=5 // pred_check
      _
    $region34: #{_lambda_.48} parent=5 // pred_check_branch
      %195 = sbr.rel (%p192) target = $region36
    $region35: #{_lambda_.48} parent=5 // pred_region
      %s196 = ssub.s32 %s10, 1
      %p197 = scmp.lt.s32.totalorder %s15, 1
      %s198 = scalar_select %p197, %s15, 1
      %s199 = smul.addr %s198, 4
      %s200 = smul.addr %s199, 8
      %s201 = scalar_lea.vmem %s0, %s200
      %p202 = pneg %p36
      %p203 = pneg %p33
      %p204 = scmp.lt.s32.totalorder %s15, 1
      %s205 = scalar_select %p204, %s15, 1
      %s206 = smul.addr %s205, 4
      %s207 = smul.addr %s206, 8
      %s208 = scalar_lea.vmem %s1, %s207
      %p209 = pneg %p62
      %p210 = pneg %p59
      %p211 = scmp.lt.s32.totalorder %s15, 1
      %s212 = scalar_select %p211, %s15, 1
      %s213 = smul.addr %s212, 4
      %s214 = smul.addr %s213, 8
      %s215 = scalar_lea.vmem %s2, %s214
      %p216 = pneg %p88
      %p217 = pneg %p85
      %p218 = scmp.lt.s32.totalorder %s15, 1
      %s219 = scalar_select %p218, %s15, 1
      %s220 = smul.addr %s219, 8
      %s221 = scalar_lea.vmem %s3, %s220
      %p222 = pneg %p114
      %p223 = pneg %p111
      %p224 = pneg %p140
      %p225 = pneg %p137
      %p226 = scmp.lt.s32.totalorder %s15, 1
      %s227 = scalar_select %p226, %s15, 1
      %s228 = smul.addr %s227, 4
      %s229 = smul.addr %s228, 8
      %s230 = scalar_lea.vmem %s4, %s229
      %p231 = scmp.lt.s32.totalorder %s15, 1
      %s232 = scalar_select %p231, %s15, 1
      %s233 = smul.addr %s232, 4
      %s234 = smul.addr %s233, 8
      %s235 = scalar_lea.vmem %s0, %s234
      %p236 = scmp.lt.s32.totalorder %s15, 1
      %s237 = scalar_select %p236, %s15, 1
      %s238 = smul.addr %s237, 4
      %s239 = smul.addr %s238, 8
      %s240 = scalar_lea.vmem %s1, %s239
      %p241 = scmp.lt.s32.totalorder %s15, 1
      %s242 = scalar_select %p241, %s15, 1
      %s243 = smul.addr %s242, 4
      %s244 = smul.addr %s243, 8
      %s245 = scalar_lea.vmem %s2, %s244
      %p246 = scmp.lt.s32.totalorder %s15, 1
      %s247 = scalar_select %p246, %s15, 1
      %s248 = smul.addr %s247, 8
      %s249 = scalar_lea.vmem %s3, %s248
      %p250 = scmp.lt.s32.totalorder %s15, 1
      %s251 = scalar_select %p250, %s15, 1
      %s252 = smul.addr %s251, 4
      %s253 = smul.addr %s252, 8
      %s254 = scalar_lea.vmem %s4, %s253
      %v256 = vld [vmem:[%s235] sm:$0xff]
      %v257 = vld [vmem:[%s235 + $0x8] sm:$0xff]
      %v258 = vld [vmem:[%s235 + $0x10] sm:$0xff]
      %v259 = vld [vmem:[%s235 + $0x18] sm:$0xff]
      %v260 = vpack.c.bf16 %v256, %v256
      %v261 = vpack.c.bf16 %v257, %v257
      %v262 = vpack.c.bf16 %v258, %v258
      %v263 = vpack.c.bf16 %v259, %v259
      %v264 = vld [vmem:[%s240] sm:$0xff]
      %v265 = vld [vmem:[%s240 + $0x8] sm:$0xff]
      %v266 = vld [vmem:[%s240 + $0x10] sm:$0xff]
      %v267 = vld [vmem:[%s240 + $0x18] sm:$0xff]
      %v268 = vpack.c.bf16 %v264, %v264
      %v269 = vpack.c.bf16 %v265, %v265
      %v270 = vpack.c.bf16 %v266, %v266
      %v271 = vpack.c.bf16 %v267, %v267
      %v272 = vld [vmem:[%s245] sm:$0xff]
      %v273 = vld [vmem:[%s245 + $0x8] sm:$0xff]
      %v274 = vld [vmem:[%s245 + $0x10] sm:$0xff]
      %v275 = vld [vmem:[%s245 + $0x18] sm:$0xff]
      %v276 = vpack.c.bf16 %v272, %v272
      %v277 = vpack.c.bf16 %v273, %v273
      %v278 = vpack.c.bf16 %v274, %v274
      %v279 = vpack.c.bf16 %v275, %v275
      %vm280 = vcmask 64512
      %v282 = vsel %vm280, %v260, 0
      %v285 = vsel %vm280, %v268, 0
      %287 = vmatprep.subr.bf16.mxu0 0
      %288 = vmatpush1.bf16.xpose.msra.mxu0 %v285
      %289 = vmatprep.subr.bf16.mxu0 0
      %290 = vmatpush1.bf16.xpose.msra.mxu0 0
      %291 = vmatprep.subr.bf16.mxu0 0
      %292 = vmatpush1.bf16.xpose.msra.mxu0 0
      %293 = vmatprep.subr.bf16.mxu0 0
      %294 = vmatpush1.bf16.xpose.msra.mxu0 0
      %295 = vmatprep.subr.bf16.mxu0 0
      %296 = vmatpush1.bf16.xpose.msra.mxu0 0
      %297 = vmatprep.subr.bf16.mxu0 0
      %298 = vmatpush1.bf16.xpose.msra.mxu0 0
      %299 = vmatprep.subr.bf16.mxu0 0
      %300 = vmatpush1.bf16.xpose.msra.mxu0 0
      %301 = vmatprep.subr.bf16.mxu0 0
      %302 = vmatpush1.bf16.xpose.msra.mxu0 0
      %303 = vmatprep.subr.bf16.mxu0 0
      %304 = vmatpush1.bf16.xpose.msra.mxu0 0
      %305 = vmatprep.subr.bf16.mxu0 0
      %306 = vmatpush1.bf16.xpose.msra.mxu0 0
      %307 = vmatprep.subr.bf16.mxu0 0
      %308 = vmatpush1.bf16.xpose.msra.mxu0 0
      %309 = vmatprep.subr.bf16.mxu0 0
      %310 = vmatpush1.bf16.xpose.msra.mxu0 0
      %311 = vmatprep.subr.bf16.mxu0 0
      %312 = vmatpush1.bf16.xpose.msra.mxu0 0
      %313 = vmatprep.subr.bf16.mxu0 0
      %314 = vmatpush1.bf16.xpose.msra.mxu0 0
      %315 = vmatprep.subr.bf16.mxu0 0
      %316 = vmatpush1.bf16.xpose.msra.mxu0 0
      %317 = vmatprep.subr.bf16.mxu0 0
      %318 = vmatpush1.bf16.xpose.msra.mxu0 0
      %319 = vmatprep.mubr.bf16.mxu0 0
      %320 = vmatmul.mubr.bf16.gmra.mrb[0].mxu0 %v282
      %v321 = vpop.f32.mrb[0].mxu0
      %v322 = vadd.f32 0.0, %v321
      %v323 = vpop.f32.mrb[0].mxu0
      %v324 = vpop.f32.mrb[0].mxu0
      %v325 = vpop.f32.mrb[0].mxu0
      %326 = vdwg.mxu0
      %v328 = vsel %vm280, %v261, 0
      %v331 = vsel %vm280, %v269, 0
      %333 = vmatprep.subr.bf16.mxu0 0
      %334 = vmatpush1.bf16.xpose.msra.mxu0 %v331
      %335 = vmatprep.subr.bf16.mxu0 0
      %336 = vmatpush1.bf16.xpose.msra.mxu0 0
      %337 = vmatprep.subr.bf16.mxu0 0
      %338 = vmatpush1.bf16.xpose.msra.mxu0 0
      %339 = vmatprep.subr.bf16.mxu0 0
      %340 = vmatpush1.bf16.xpose.msra.mxu0 0
      %341 = vmatprep.subr.bf16.mxu0 0
      %342 = vmatpush1.bf16.xpose.msra.mxu0 0
      %343 = vmatprep.subr.bf16.mxu0 0
      %344 = vmatpush1.bf16.xpose.msra.mxu0 0
      %345 = vmatprep.subr.bf16.mxu0 0
      %346 = vmatpush1.bf16.xpose.msra.mxu0 0
      %347 = vmatprep.subr.bf16.mxu0 0
      %348 = vmatpush1.bf16.xpose.msra.mxu0 0
      %349 = vmatprep.subr.bf16.mxu0 0
      %350 = vmatpush1.bf16.xpose.msra.mxu0 0
      %351 = vmatprep.subr.bf16.mxu0 0
      %352 = vmatpush1.bf16.xpose.msra.mxu0 0
      %353 = vmatprep.subr.bf16.mxu0 0
      %354 = vmatpush1.bf16.xpose.msra.mxu0 0
      %355 = vmatprep.subr.bf16.mxu0 0
      %356 = vmatpush1.bf16.xpose.msra.mxu0 0
      %357 = vmatprep.subr.bf16.mxu0 0
      %358 = vmatpush1.bf16.xpose.msra.mxu0 0
      %359 = vmatprep.subr.bf16.mxu0 0
      %360 = vmatpush1.bf16.xpose.msra.mxu0 0
      %361 = vmatprep.subr.bf16.mxu0 0
      %362 = vmatpush1.bf16.xpose.msra.mxu0 0
      %363 = vmatprep.subr.bf16.mxu0 0
      %364 = vmatpush1.bf16.xpose.msra.mxu0 0
      %365 = vmatprep.mubr.bf16.mxu0 0
      %366 = vmatmul.mubr.bf16.gmra.mrb[0].mxu0 %v328
      %v367 = vpop.f32.mrb[0].mxu0
      %v368 = vadd.f32 0.0, %v367
      %v369 = vpop.f32.mrb[0].mxu0
      %v370 = vpop.f32.mrb[0].mxu0
      %v371 = vpop.f32.mrb[0].mxu0
      %372 = vdwg.mxu0
      %v374 = vsel %vm280, %v262, 0
      %v377 = vsel %vm280, %v270, 0
      %379 = vmatprep.subr.bf16.mxu0 0
      %380 = vmatpush1.bf16.xpose.msra.mxu0 %v377
      %381 = vmatprep.subr.bf16.mxu0 0
      %382 = vmatpush1.bf16.xpose.msra.mxu0 0
      %383 = vmatprep.subr.bf16.mxu0 0
      %384 = vmatpush1.bf16.xpose.msra.mxu0 0
      %385 = vmatprep.subr.bf16.mxu0 0
      %386 = vmatpush1.bf16.xpose.msra.mxu0 0
      %387 = vmatprep.subr.bf16.mxu0 0
      %388 = vmatpush1.bf16.xpose.msra.mxu0 0
      %389 = vmatprep.subr.bf16.mxu0 0
      %390 = vmatpush1.bf16.xpose.msra.mxu0 0
      %391 = vmatprep.subr.bf16.mxu0 0
      %392 = vmatpush1.bf16.xpose.msra.mxu0 0
      %393 = vmatprep.subr.bf16.mxu0 0
      %394 = vmatpush1.bf16.xpose.msra.mxu0 0
      %395 = vmatprep.subr.bf16.mxu0 0
      %396 = vmatpush1.bf16.xpose.msra.mxu0 0
      %397 = vmatprep.subr.bf16.mxu0 0
      %398 = vmatpush1.bf16.xpose.msra.mxu0 0
      %399 = vmatprep.subr.bf16.mxu0 0
      %400 = vmatpush1.bf16.xpose.msra.mxu0 0
      %401 = vmatprep.subr.bf16.mxu0 0
      %402 = vmatpush1.bf16.xpose.msra.mxu0 0
      %403 = vmatprep.subr.bf16.mxu0 0
      %404 = vmatpush1.bf16.xpose.msra.mxu0 0
      %405 = vmatprep.subr.bf16.mxu0 0
      %406 = vmatpush1.bf16.xpose.msra.mxu0 0
      %407 = vmatprep.subr.bf16.mxu0 0
      %408 = vmatpush1.bf16.xpose.msra.mxu0 0
      %409 = vmatprep.subr.bf16.mxu0 0
      %410 = vmatpush1.bf16.xpose.msra.mxu0 0
      %411 = vmatprep.mubr.bf16.mxu0 0
      %412 = vmatmul.mubr.bf16.gmra.mrb[0].mxu0 %v374
      %v413 = vpop.f32.mrb[0].mxu0
      %v414 = vadd.f32 0.0, %v413
      %v415 = vpop.f32.mrb[0].mxu0
      %v416 = vpop.f32.mrb[0].mxu0
      %v417 = vpop.f32.mrb[0].mxu0
      %418 = vdwg.mxu0
      %v420 = vsel %vm280, %v263, 0
      %v423 = vsel %vm280, %v271, 0
      %425 = vmatprep.subr.bf16.mxu0 0
      %426 = vmatpush1.bf16.xpose.msra.mxu0 %v423
      %427 = vmatprep.subr.bf16.mxu0 0
      %428 = vmatpush1.bf16.xpose.msra.mxu0 0
      %429 = vmatprep.subr.bf16.mxu0 0
      %430 = vmatpush1.bf16.xpose.msra.mxu0 0
      %431 = vmatprep.subr.bf16.mxu0 0
      %432 = vmatpush1.bf16.xpose.msra.mxu0 0
      %433 = vmatprep.subr.bf16.mxu0 0
      %434 = vmatpush1.bf16.xpose.msra.mxu0 0
      %435 = vmatprep.subr.bf16.mxu0 0
      %436 = vmatpush1.bf16.xpose.msra.mxu0 0
      %437 = vmatprep.subr.bf16.mxu0 0
      %438 = vmatpush1.bf16.xpose.msra.mxu0 0
      %439 = vmatprep.subr.bf16.mxu0 0
      %440 = vmatpush1.bf16.xpose.msra.mxu0 0
      %441 = vmatprep.subr.bf16.mxu0 0
      %442 = vmatpush1.bf16.xpose.msra.mxu0 0
      %443 = vmatprep.subr.bf16.mxu0 0
      %444 = vmatpush1.bf16.xpose.msra.mxu0 0
      %445 = vmatprep.subr.bf16.mxu0 0
      %446 = vmatpush1.bf16.xpose.msra.mxu0 0
      %447 = vmatprep.subr.bf16.mxu0 0
      %448 = vmatpush1.bf16.xpose.msra.mxu0 0
      %449 = vmatprep.subr.bf16.mxu0 0
      %450 = vmatpush1.bf16.xpose.msra.mxu0 0
      %451 = vmatprep.subr.bf16.mxu0 0
      %452 = vmatpush1.bf16.xpose.msra.mxu0 0
      %453 = vmatprep.subr.bf16.mxu0 0
      %454 = vmatpush1.bf16.xpose.msra.mxu0 0
      %455 = vmatprep.subr.bf16.mxu0 0
      %456 = vmatpush1.bf16.xpose.msra.mxu0 0
      %457 = vmatprep.mubr.bf16.mxu0 0
      %458 = vmatmul.mubr.bf16.gmra.mrb[0].mxu0 %v420
      %v459 = vpop.f32.mrb[0].mxu0
      %v460 = vadd.f32 0.0, %v459
      %v461 = vpop.f32.mrb[0].mxu0
      %v462 = vpop.f32.mrb[0].mxu0
      %v463 = vpop.f32.mrb[0].mxu0
      %464 = vdwg.mxu0
      %v465 = vmul.f32 %v322, 0.35355338
      %v466 = vmul.f32 %v368, 0.35355338
      %v467 = vmul.f32 %v414, 0.35355338
      %v468 = vmul.f32 %v460, 0.35355338
      %v469 = vld [vmem:[%s249] sm:$0xff]
      %vm470 = vcmp.ne.f32.partialorder %v469, 0.0
      %v471 = vlaneseq
      %v472 = vshrl.u32 %v471, 7
      %v473 = vlaneseq
      %v474 = vand.u32 %v473, 127
      %vm475 = vcmp.le.s32.totalorder %v474, %v472
      %v476 = vsel %vm470, 1, 0
      %477 = vset.pattern.permute.xlu0 0
      %478 = vperm.xlu0 %477, %v476
      %v479 = vpop.permute.xlu0 %478
      %vm480 = vcmp.eq.s32.totalorder %v479, 1
      %vm481 = vmand %vm480, %vm475
      %v482 = vsel %vm481, 1, 0
      %vm483 = vcmp.eq.s32.totalorder %v482, 1
      %v484 = vsel %vm483, %v465, -1e+09
      %v485 = vsel %vm483, %v466, -1e+09
      %v486 = vsel %vm483, %v467, -1e+09
      %v487 = vsel %vm483, %v468, -1e+09
      %v488 = vsel %vm280, %v484, -inf
      %489 = vmax.xlane.f32.xlu0 %v488
      %v490 = vpop.xlane.xlu0 %489
      %v491 = vsel %vm280, %v485, -inf
      %492 = vmax.xlane.f32.xlu0 %v491
      %v493 = vpop.xlane.xlu0 %492
      %v494 = vsel %vm280, %v486, -inf
      %495 = vmax.xlane.f32.xlu0 %v494
      %v496 = vpop.xlane.xlu0 %495
      %v497 = vsel %vm280, %v487, -inf
      %498 = vmax.xlane.f32.xlu0 %v497
      %v499 = vpop.xlane.xlu0 %498
      %v500 = vsub.f32 %v484, %v490
      %v501 = vsub.f32 %v485, %v493
      %v502 = vsub.f32 %v486, %v496
      %v503 = vsub.f32 %v487, %v499
      %v504 = vmul.f32 %v500, 1.442695
      %v505 = vpow.pop %v504
      %v506 = vmul.f32 %v501, 1.442695
      %v507 = vpow.pop %v506
      %v508 = vmul.f32 %v502, 1.442695
      %v509 = vpow.pop %v508
      %v510 = vmul.f32 %v503, 1.442695
      %v511 = vpow.pop %v510
      %v512 = vsel %vm280, %v505, 0.0
      %513 = vadd.xlane.f32.xlu0 %v512
      %v514 = vpop.xlane.xlu0 %513
      %v515 = vsel %vm280, %v507, 0.0
      %516 = vadd.xlane.f32.xlu0 %v515
      %v517 = vpop.xlane.xlu0 %516
      %v518 = vsel %vm280, %v509, 0.0
      %519 = vadd.xlane.f32.xlu0 %v518
      %v520 = vpop.xlane.xlu0 %519
      %v521 = vsel %vm280, %v511, 0.0
      %522 = vadd.xlane.f32.xlu0 %v521
      %v523 = vpop.xlane.xlu0 %522
      %v524 = vrcp.pop %v514
      %v525 = vrcp.pop %v517
      %v526 = vrcp.pop %v520
      %v527 = vrcp.pop %v523
      %v528 = vmul.f32 %v505, %v524
      %v529 = vmul.f32 %v507, %v525
      %v530 = vmul.f32 %v509, %v526
      %v531 = vmul.f32 %v511, %v527
      %v532 = vpack.c.bf16 %v528, %v528
      %v533 = vpack.c.bf16 %v529, %v529
      %v534 = vpack.c.bf16 %v530, %v530
      %v535 = vpack.c.bf16 %v531, %v531
      %v537 = vsel %vm280, %v532, 0
      %vm539 = vcmask 1043456
      %v541 = vsel %vm539, %v276, 0
      %543 = vmatprep.subr.bf16.mxu0 0
      %544 = vmatpush1.bf16.msra.mxu0 %v541
      %545 = vmatprep.subr.bf16.mxu0 0
      %546 = vmatpush1.bf16.msra.mxu0 0
      %547 = vmatprep.subr.bf16.mxu0 0
      %548 = vmatpush1.bf16.msra.mxu0 0
      %549 = vmatprep.subr.bf16.mxu0 0
      %550 = vmatpush1.bf16.msra.mxu0 0
      %551 = vmatprep.subr.bf16.mxu0 0
      %552 = vmatpush1.bf16.msra.mxu0 0
      %553 = vmatprep.subr.bf16.mxu0 0
      %554 = vmatpush1.bf16.msra.mxu0 0
      %555 = vmatprep.subr.bf16.mxu0 0
      %556 = vmatpush1.bf16.msra.mxu0 0
      %557 = vmatprep.subr.bf16.mxu0 0
      %558 = vmatpush1.bf16.msra.mxu0 0
      %559 = vmatprep.subr.bf16.mxu0 0
      %560 = vmatpush1.bf16.msra.mxu0 0
      %561 = vmatprep.subr.bf16.mxu0 0
      %562 = vmatpush1.bf16.msra.mxu0 0
      %563 = vmatprep.subr.bf16.mxu0 0
      %564 = vmatpush1.bf16.msra.mxu0 0
      %565 = vmatprep.subr.bf16.mxu0 0
      %566 = vmatpush1.bf16.msra.mxu0 0
      %567 = vmatprep.subr.bf16.mxu0 0
      %568 = vmatpush1.bf16.msra.mxu0 0
      %569 = vmatprep.subr.bf16.mxu0 0
      %570 = vmatpush1.bf16.msra.mxu0 0
      %571 = vmatprep.subr.bf16.mxu0 0
      %572 = vmatpush1.bf16.msra.mxu0 0
      %573 = vmatprep.subr.bf16.mxu0 0
      %574 = vmatpush1.bf16.msra.mxu0 0
      %575 = vmatprep.mubr.bf16.mxu0 0
      %576 = vmatmul.mubr.bf16.gmra.mrb[0].mxu0 %v537
      %v577 = vpop.f32.mrb[0].mxu0
      %v578 = vadd.f32 0.0, %v577
      %v579 = vpop.f32.mrb[0].mxu0
      %v580 = vpop.f32.mrb[0].mxu0
      %v581 = vpop.f32.mrb[0].mxu0
      %582 = vdwg.mxu0
      %v584 = vsel %vm280, %v533, 0
      %v587 = vsel %vm539, %v277, 0
      %589 = vmatprep.subr.bf16.mxu0 0
      %590 = vmatpush1.bf16.msra.mxu0 %v587
      %591 = vmatprep.subr.bf16.mxu0 0
      %592 = vmatpush1.bf16.msra.mxu0 0
      %593 = vmatprep.subr.bf16.mxu0 0
      %594 = vmatpush1.bf16.msra.mxu0 0
      %595 = vmatprep.subr.bf16.mxu0 0
      %596 = vmatpush1.bf16.msra.mxu0 0
      %597 = vmatprep.subr.bf16.mxu0 0
      %598 = vmatpush1.bf16.msra.mxu0 0
      %599 = vmatprep.subr.bf16.mxu0 0
      %600 = vmatpush1.bf16.msra.mxu0 0
      %601 = vmatprep.subr.bf16.mxu0 0
      %602 = vmatpush1.bf16.msra.mxu0 0
      %603 = vmatprep.subr.bf16.mxu0 0
      %604 = vmatpush1.bf16.msra.mxu0 0
      %605 = vmatprep.subr.bf16.mxu0 0
      %606 = vmatpush1.bf16.msra.mxu0 0
      %607 = vmatprep.subr.bf16.mxu0 0
      %608 = vmatpush1.bf16.msra.mxu0 0
      %609 = vmatprep.subr.bf16.mxu0 0
      %610 = vmatpush1.bf16.msra.mxu0 0
      %611 = vmatprep.subr.bf16.mxu0 0
      %612 = vmatpush1.bf16.msra.mxu0 0
      %613 = vmatprep.subr.bf16.mxu0 0
      %614 = vmatpush1.bf16.msra.mxu0 0
      %615 = vmatprep.subr.bf16.mxu0 0
      %616 = vmatpush1.bf16.msra.mxu0 0
      %617 = vmatprep.subr.bf16.mxu0 0
      %618 = vmatpush1.bf16.msra.mxu0 0
      %619 = vmatprep.subr.bf16.mxu0 0
      %620 = vmatpush1.bf16.msra.mxu0 0
      %621 = vmatprep.mubr.bf16.mxu0 0
      %622 = vmatmul.mubr.bf16.gmra.mrb[0].mxu0 %v584
      %v623 = vpop.f32.mrb[0].mxu0
      %v624 = vadd.f32 0.0, %v623
      %v625 = vpop.f32.mrb[0].mxu0
      %v626 = vpop.f32.mrb[0].mxu0
      %v627 = vpop.f32.mrb[0].mxu0
      %628 = vdwg.mxu0
      %v630 = vsel %vm280, %v534, 0
      %v633 = vsel %vm539, %v278, 0
      %635 = vmatprep.subr.bf16.mxu0 0
      %636 = vmatpush1.bf16.msra.mxu0 %v633
      %637 = vmatprep.subr.bf16.mxu0 0
      %638 = vmatpush1.bf16.msra.mxu0 0
      %639 = vmatprep.subr.bf16.mxu0 0
      %640 = vmatpush1.bf16.msra.mxu0 0
      %641 = vmatprep.subr.bf16.mxu0 0
      %642 = vmatpush1.bf16.msra.mxu0 0
      %643 = vmatprep.subr.bf16.mxu0 0
      %644 = vmatpush1.bf16.msra.mxu0 0
      %645 = vmatprep.subr.bf16.mxu0 0
      %646 = vmatpush1.bf16.msra.mxu0 0
      %647 = vmatprep.subr.bf16.mxu0 0
      %648 = vmatpush1.bf16.msra.mxu0 0
      %649 = vmatprep.subr.bf16.mxu0 0
      %650 = vmatpush1.bf16.msra.mxu0 0
      %651 = vmatprep.subr.bf16.mxu0 0
      %652 = vmatpush1.bf16.msra.mxu0 0
      %653 = vmatprep.subr.bf16.mxu0 0
      %654 = vmatpush1.bf16.msra.mxu0 0
      %655 = vmatprep.subr.bf16.mxu0 0
      %656 = vmatpush1.bf16.msra.mxu0 0
      %657 = vmatprep.subr.bf16.mxu0 0
      %658 = vmatpush1.bf16.msra.mxu0 0
      %659 = vmatprep.subr.bf16.mxu0 0
      %660 = vmatpush1.bf16.msra.mxu0 0
      %661 = vmatprep.subr.bf16.mxu0 0
      %662 = vmatpush1.bf16.msra.mxu0 0
      %663 = vmatprep.subr.bf16.mxu0 0
      %664 = vmatpush1.bf16.msra.mxu0 0
      %665 = vmatprep.subr.bf16.mxu0 0
      %666 = vmatpush1.bf16.msra.mxu0 0
      %667 = vmatprep.mubr.bf16.mxu0 0
      %668 = vmatmul.mubr.bf16.gmra.mrb[0].mxu0 %v630
      %v669 = vpop.f32.mrb[0].mxu0
      %v670 = vadd.f32 0.0, %v669
      %v671 = vpop.f32.mrb[0].mxu0
      %v672 = vpop.f32.mrb[0].mxu0
      %v673 = vpop.f32.mrb[0].mxu0
      %674 = vdwg.mxu0
      %v676 = vsel %vm280, %v535, 0
      %v679 = vsel %vm539, %v279, 0
      %681 = vmatprep.subr.bf16.mxu0 0
      %682 = vmatpush1.bf16.msra.mxu0 %v679
      %683 = vmatprep.subr.bf16.mxu0 0
      %684 = vmatpush1.bf16.msra.mxu0 0
      %685 = vmatprep.subr.bf16.mxu0 0
      %686 = vmatpush1.bf16.msra.mxu0 0
      %687 = vmatprep.subr.bf16.mxu0 0
      %688 = vmatpush1.bf16.msra.mxu0 0
      %689 = vmatprep.subr.bf16.mxu0 0
      %690 = vmatpush1.bf16.msra.mxu0 0
      %691 = vmatprep.subr.bf16.mxu0 0
      %692 = vmatpush1.bf16.msra.mxu0 0
      %693 = vmatprep.subr.bf16.mxu0 0
      %694 = vmatpush1.bf16.msra.mxu0 0
      %695 = vmatprep.subr.bf16.mxu0 0
      %696 = vmatpush1.bf16.msra.mxu0 0
      %697 = vmatprep.subr.bf16.mxu0 0
      %698 = vmatpush1.bf16.msra.mxu0 0
      %699 = vmatprep.subr.bf16.mxu0 0
      %700 = vmatpush1.bf16.msra.mxu0 0
      %701 = vmatprep.subr.bf16.mxu0 0
      %702 = vmatpush1.bf16.msra.mxu0 0
      %703 = vmatprep.subr.bf16.mxu0 0
      %704 = vmatpush1.bf16.msra.mxu0 0
      %705 = vmatprep.subr.bf16.mxu0 0
      %706 = vmatpush1.bf16.msra.mxu0 0
      %707 = vmatprep.subr.bf16.mxu0 0
      %708 = vmatpush1.bf16.msra.mxu0 0
      %709 = vmatprep.subr.bf16.mxu0 0
      %710 = vmatpush1.bf16.msra.mxu0 0
      %711 = vmatprep.subr.bf16.mxu0 0
      %712 = vmatpush1.bf16.msra.mxu0 0
      %713 = vmatprep.mubr.bf16.mxu0 0
      %714 = vmatmul.mubr.bf16.gmra.mrb[0].mxu0 %v676
      %v715 = vpop.f32.mrb[0].mxu0
      %v716 = vadd.f32 0.0, %v715
      %v717 = vpop.f32.mrb[0].mxu0
      %v718 = vpop.f32.mrb[0].mxu0
      %v719 = vpop.f32.mrb[0].mxu0
      %720 = vdwg.mxu0
      %721 = vst.msk [vmem:[%s254] sm:$0xff] %vm280, %v578
      %722 = vst.msk [vmem:[%s254 + $0x8] sm:$0xff] %vm280, %v624
      %723 = vst.msk [vmem:[%s254 + $0x10] sm:$0xff] %vm280, %v670
      %724 = vst.msk [vmem:[%s254 + $0x18] sm:$0xff] %vm280, %v716
      %p725 = scmp.lt.s32.totalorder %s15, 1
      %s726 = scalar_select %p725, %s15, 1
      %s727 = smul.addr %s726, 4
      %s728 = smul.addr %s727, 8
      %s729 = scalar_lea.vmem %s4, %s728
      // Predicated region
      $region37: #{_lambda_.48} parent=35 // pred_check
        %p730 = pneg %p137
      $region38: #{_lambda_.48} parent=35 // pred_check_branch
        %732 = sbr.rel (%p730) target = $region40
      $region39: #{_lambda_.48} parent=35 // pred_region
        _
      $region40: #{_lambda_.48} parent=35 // pred_fallthru
        _
    $region36: #{_lambda_.48} parent=5 // pred_fallthru
      _
    %p733 = scmp.le.s32.totalorder 2, %s10
    // Predicated region
    $region41: #{_lambda_.48} parent=5 // pred_check
      %p734 = pneg %p733
    $region42: #{_lambda_.48} parent=5 // pred_check_branch
      %736 = sbr.rel (%p734) target = $region44
    $region43: #{_lambda_.48} parent=5 // pred_region
      %s737 = ssub.s32 %s10, 2
      // Predicated region
      $region45: #{_lambda_.48} parent=43 // pred_check
        %p738 = pneg %p143
      $region46: #{_lambda_.48} parent=43 // pred_check_branch
        %740 = sbr.rel (%p738) target = $region48
      $region47: #{_lambda_.48} parent=43 // pred_region
        %p741 = scmp.lt.s32.totalorder %s16, 1
        %s742 = scalar_select %p741, %s16, 1
        %s743 = smul.addr %s742, 4
        %s744 = smul.addr %s743, 8
        %s745 = scalar_lea.vmem %s4, %s744
      $region48: #{_lambda_.48} parent=43 // pred_fallthru
        _
    $region44: #{_lambda_.48} parent=5 // pred_fallthru
      _
  $region6: #{_lambda_.48} parent=0 // loop_footer
    %s14 = sadd.s32 1, %s10
  $region7: #{_lambda_.48} parent=0 // loop_footer_branch
    %9 = sbr.rel target = $region3
  $region8: #{_lambda_.48} parent=0 // loop_exit
    _

// kernel: _lambda_.39
$region0: #{_lambda_.39}
  #allocation0 [shape = 'u32[]', space=smem, size = 0x4, offset = 0x4, fixed_abs, tag = 'smem constant byte address 0x4 - core index']
  #allocation1 [shape = 'u32[144,128]{1,0:T(1,128)}', space=vmem, size = 0x12000, scoped, tag = 'internal scratch']
  %s0 = inlined_call_operand.vmem [shape: f32[16,32], index: 0, kind: input, shape index: {}]
  %s1 = inlined_call_operand.vmem [shape: bf16[32,64], index: 1, kind: input, shape index: {}]
  %s2 = inlined_call_operand.vmem [shape: f32[1,64], index: 2, kind: input, shape index: {}]
  %s3 = inlined_call_operand.vmem [shape: bf16[64,32], index: 3, kind: input, shape index: {}]
  %s4 = inlined_call_operand.vmem [shape: f32[1,32], index: 4, kind: input, shape index: {}]
  %s5 = inlined_call_operand.vmem [shape: f32[16,32], index: 5, kind: output, shape index: {}]
  %s6 = sld [smem:[#allocation0]]
  $region30: #{_lambda_.39} parent=0
    _
  %s8 = ssub.s32 1, %s6
  %s9 = scalar_select 0, %s8, %s6
  // Predicated region
  $region2: #{_lambda_.39} parent=0 // pred_check
    _
  $region3: #{_lambda_.39} parent=0 // pred_check_branch
    %11 = sbr.rel (0) target = $region5
  $region4: #{_lambda_.39} parent=0 // pred_region
    _
  $region5: #{_lambda_.39} parent=0 // pred_fallthru
    _
  // Predicated region
  $region6: #{_lambda_.39} parent=0 // pred_check
    _
  $region7: #{_lambda_.39} parent=0 // pred_check_branch
    %13 = sbr.rel (0) target = $region9
  $region8: #{_lambda_.39} parent=0 // pred_region
    _
  $region9: #{_lambda_.39} parent=0 // pred_fallthru
    _
  // Predicated region
  $region10: #{_lambda_.39} parent=0 // pred_check
    _
  $region11: #{_lambda_.39} parent=0 // pred_check_branch
    %15 = sbr.rel (0) target = $region13
  $region12: #{_lambda_.39} parent=0 // pred_region
    _
  $region13: #{_lambda_.39} parent=0 // pred_fallthru
    _
  // Predicated region
  $region14: #{_lambda_.39} parent=0 // pred_check
    _
  $region15: #{_lambda_.39} parent=0 // pred_check_branch
    %17 = sbr.rel (0) target = $region17
  $region16: #{_lambda_.39} parent=0 // pred_region
    _
  $region17: #{_lambda_.39} parent=0 // pred_fallthru
    _
  // Predicated region
  $region18: #{_lambda_.39} parent=0 // pred_check
    _
  $region19: #{_lambda_.39} parent=0 // pred_check_branch
    %19 = sbr.rel (0) target = $region21
  $region20: #{_lambda_.39} parent=0 // pred_region
    _
  $region21: #{_lambda_.39} parent=0 // pred_fallthru
    _
  %v21 = vld [vmem:[%s0] sm:$0xff]
  %v22 = vld [vmem:[%s0 + $0x8] sm:$0xff]
  %v23 = vpack.c.bf16 %v22, %v21
  %v24 = vld [vmem:[%s1] sm:$0xf]
  %v25 = vld [vmem:[%s1 + $0x4] sm:$0xf]
  %v26 = vld [vmem:[%s1 + $0x8] sm:$0xf]
  %v27 = vld [vmem:[%s1 + $0xc] sm:$0xf]
  %v28 = vld [vmem:[%s2] sm:$0x1]
  %v30 = vlaneseq
  %v31 = vshrl.u32 %v30, 7
  %v32 = vsub.s32 0, %v31
  %v33 = vrot.slane %v28, %v32
  %v39 = vunpack.c.l.b16 %v24
  %v40 = vunpack.c.l.b16 %v25
  %v41 = vunpack.c.l.b16 %v26
  %v42 = vunpack.c.l.b16 %v27
  %v43 = vpack.c.b16 %v40, %v39
  %v44 = vpack.c.b16 %v42, %v41
  %vm47 = vcmask 261120
  %v49 = vsel %vm47, %v23, 0
  %51 = vmatprep.subr.bf16.mxu0 0
  %52 = vmatpush1.bf16.msra.mxu0 %v43
  %53 = vmatprep.subr.bf16.mxu0 0
  %54 = vmatpush1.bf16.msra.mxu0 %v44
  %55 = vmatprep.subr.bf16.mxu0 0
  %56 = vmatpush1.bf16.msra.mxu0 0
  %57 = vmatprep.subr.bf16.mxu0 0
  %58 = vmatpush1.bf16.msra.mxu0 0
  %59 = vmatprep.subr.bf16.mxu0 0
  %60 = vmatpush1.bf16.msra.mxu0 0
  %61 = vmatprep.subr.bf16.mxu0 0
  %62 = vmatpush1.bf16.msra.mxu0 0
  %63 = vmatprep.subr.bf16.mxu0 0
  %64 = vmatpush1.bf16.msra.mxu0 0
  %65 = vmatprep.subr.bf16.mxu0 0
  %66 = vmatpush1.bf16.msra.mxu0 0
  %67 = vmatprep.subr.bf16.mxu0 0
  %68 = vmatpush1.bf16.msra.mxu0 0
  %69 = vmatprep.subr.bf16.mxu0 0
  %70 = vmatpush1.bf16.msra.mxu0 0
  %71 = vmatprep.subr.bf16.mxu0 0
  %72 = vmatpush1.bf16.msra.mxu0 0
  %73 = vmatprep.subr.bf16.mxu0 0
  %74 = vmatpush1.bf16.msra.mxu0 0
  %75 = vmatprep.subr.bf16.mxu0 0
  %76 = vmatpush1.bf16.msra.mxu0 0
  %77 = vmatprep.subr.bf16.mxu0 0
  %78 = vmatpush1.bf16.msra.mxu0 0
  %79 = vmatprep.subr.bf16.mxu0 0
  %80 = vmatpush1.bf16.msra.mxu0 0
  %81 = vmatprep.subr.bf16.mxu0 0
  %82 = vmatpush1.bf16.msra.mxu0 0
  %83 = vmatprep.mubr.bf16.mxu0 0
  %84 = vmatmul.mubr.bf16.gmra.mrb[0].mxu0 %v49
  %v85 = vpop.f32.mrb[0].mxu0
  %v86 = vadd.f32 %v33, %v85
  %v87 = vpop.f32.mrb[0].mxu0
  %v88 = vpop.f32.mrb[0].mxu0
  %v89 = vadd.f32 %v33, %v88
  %v90 = vpop.f32.mrb[0].mxu0
  %91 = vdwg.mxu0
  %v92 = vmax.f32 %v86, 0.0
  %v93 = vmax.f32 %v89, 0.0
  %v94 = vpack.c.bf16 %v93, %v92
  %v95 = vld [vmem:[%s3] sm:$0xf]
  %v96 = vld [vmem:[%s3 + $0x4] sm:$0xf]
  %v97 = vld [vmem:[%s3 + $0x8] sm:$0xf]
  %v98 = vld [vmem:[%s3 + $0xc] sm:$0xf]
  %v99 = vld [vmem:[%s3 + $0x10] sm:$0xf]
  %v100 = vld [vmem:[%s3 + $0x14] sm:$0xf]
  %v101 = vld [vmem:[%s3 + $0x18] sm:$0xf]
  %v102 = vld [vmem:[%s3 + $0x1c] sm:$0xf]
  %v103 = vld [vmem:[%s4] sm:$0x1]
  %v105 = vlaneseq
  %v106 = vshrl.u32 %v105, 7
  %v107 = vsub.s32 0, %v106
  %v108 = vrot.slane %v103, %v107
  %v118 = vunpack.c.l.b16 %v95
  %v119 = vunpack.c.l.b16 %v96
  %v120 = vunpack.c.l.b16 %v97
  %v121 = vunpack.c.l.b16 %v98
  %v122 = vunpack.c.l.b16 %v99
  %v123 = vunpack.c.l.b16 %v100
  %v124 = vunpack.c.l.b16 %v101
  %v125 = vunpack.c.l.b16 %v102
  %v126 = vpack.c.b16 %v119, %v118
  %v127 = vpack.c.b16 %v121, %v120
  %v128 = vpack.c.b16 %v123, %v122
  %v129 = vpack.c.b16 %v125, %v124
  %vm134 = vcmask 523264
  %v136 = vsel %vm134, %v94, 0
  %138 = vmatprep.subr.bf16.mxu0 0
  %139 = vmatpush1.bf16.msra.mxu0 %v126
  %140 = vmatprep.subr.bf16.mxu0 0
  %141 = vmatpush1.bf16.msra.mxu0 %v127
  %142 = vmatprep.subr.bf16.mxu0 0
  %143 = vmatpush1.bf16.msra.mxu0 %v128
  %144 = vmatprep.subr.bf16.mxu0 0
  %145 = vmatpush1.bf16.msra.mxu0 %v129
  %146 = vmatprep.subr.bf16.mxu0 0
  %147 = vmatpush1.bf16.msra.mxu0 0
  %148 = vmatprep.subr.bf16.mxu0 0
  %149 = vmatpush1.bf16.msra.mxu0 0
  %150 = vmatprep.subr.bf16.mxu0 0
  %151 = vmatpush1.bf16.msra.mxu0 0
  %152 = vmatprep.subr.bf16.mxu0 0
  %153 = vmatpush1.bf16.msra.mxu0 0
  %154 = vmatprep.subr.bf16.mxu0 0
  %155 = vmatpush1.bf16.msra.mxu0 0
  %156 = vmatprep.subr.bf16.mxu0 0
  %157 = vmatpush1.bf16.msra.mxu0 0
  %158 = vmatprep.subr.bf16.mxu0 0
  %159 = vmatpush1.bf16.msra.mxu0 0
  %160 = vmatprep.subr.bf16.mxu0 0
  %161 = vmatpush1.bf16.msra.mxu0 0
  %162 = vmatprep.subr.bf16.mxu0 0
  %163 = vmatpush1.bf16.msra.mxu0 0
  %164 = vmatprep.subr.bf16.mxu0 0
  %165 = vmatpush1.bf16.msra.mxu0 0
  %166 = vmatprep.subr.bf16.mxu0 0
  %167 = vmatpush1.bf16.msra.mxu0 0
  %168 = vmatprep.subr.bf16.mxu0 0
  %169 = vmatpush1.bf16.msra.mxu0 0
  %170 = vmatprep.mubr.bf16.mxu0 0
  %171 = vmatmul.mubr.bf16.gmra.mrb[0].mxu0 %v136
  %v172 = vpop.f32.mrb[0].mxu0
  %v173 = vadd.f32 %v108, %v172
  %v174 = vpop.f32.mrb[0].mxu0
  %v175 = vpop.f32.mrb[0].mxu0
  %v176 = vadd.f32 %v108, %v175
  %v177 = vpop.f32.mrb[0].mxu0
  %178 = vdwg.mxu0
  %179 = vst.msk [vmem:[%s5] sm:$0xff] %vm47, %v173
  %180 = vst.msk [vmem:[%s5 + $0x8] sm:$0xff] %vm47, %v176
  // Predicated region
  $region22: #{_lambda_.39} parent=0 // pred_check
    _
  $region23: #{_lambda_.39} parent=0 // pred_check_branch
    %182 = sbr.rel (0) target = $region25
  $region24: #{_lambda_.39} parent=0 // pred_region
    _
  $region25: #{_lambda_.39} parent=0 // pred_fallthru
    _
  // Predicated region
  $region26: #{_lambda_.39} parent=0 // pred_check
    _
  $region27: #{_lambda_.39} parent=0 // pred_check_branch
    %184 = sbr.rel (0) target = $region29
  $region28: #{_lambda_.39} parent=0 // pred_region
    _
  $region29: #{_lambda_.39} parent=0 // pred_fallthru
    _

// kernel: _lambda_.52
$region0: #{_lambda_.52}
  #allocation0 [shape = 'u32[]', space=smem, size = 0x4, offset = 0x4, fixed_abs, tag = 'smem constant byte address 0x4 - core index']
  #allocation1 [shape = 'u32[144,128]{1,0:T(1,128)}', space=vmem, size = 0x12000, scoped, tag = 'internal scratch']
  %s0 = inlined_call_operand.vmem [shape: f32[16,32], index: 0, kind: input, shape index: {}]
  %s1 = inlined_call_operand.vmem [shape: bf16[32,64], index: 1, kind: input, shape index: {}]
  %s2 = inlined_call_operand.vmem [shape: f32[1,64], index: 2, kind: input, shape index: {}]
  %s3 = inlined_call_operand.vmem [shape: f32[16,64], index: 3, kind: output, shape index: {}]
  %s4 = sld [smem:[#allocation0]]
  $region22: #{_lambda_.52} parent=0
    _
  %s6 = ssub.s32 1, %s4
  %s7 = scalar_select 0, %s6, %s4
  // Predicated region
  $region2: #{_lambda_.52} parent=0 // pred_check
    _
  $region3: #{_lambda_.52} parent=0 // pred_check_branch
    %9 = sbr.rel (0) target = $region5
  $region4: #{_lambda_.52} parent=0 // pred_region
    _
  $region5: #{_lambda_.52} parent=0 // pred_fallthru
    _
  // Predicated region
  $region6: #{_lambda_.52} parent=0 // pred_check
    _
  $region7: #{_lambda_.52} parent=0 // pred_check_branch
    %11 = sbr.rel (0) target = $region9
  $region8: #{_lambda_.52} parent=0 // pred_region
    _
  $region9: #{_lambda_.52} parent=0 // pred_fallthru
    _
  // Predicated region
  $region10: #{_lambda_.52} parent=0 // pred_check
    _
  $region11: #{_lambda_.52} parent=0 // pred_check_branch
    %13 = sbr.rel (0) target = $region13
  $region12: #{_lambda_.52} parent=0 // pred_region
    _
  $region13: #{_lambda_.52} parent=0 // pred_fallthru
    _
  %v15 = vld [vmem:[%s0] sm:$0xff]
  %v16 = vld [vmem:[%s0 + $0x8] sm:$0xff]
  %v17 = vpack.c.bf16 %v16, %v15
  %v18 = vld [vmem:[%s1] sm:$0xf]
  %v19 = vld [vmem:[%s1 + $0x4] sm:$0xf]
  %v20 = vld [vmem:[%s1 + $0x8] sm:$0xf]
  %v21 = vld [vmem:[%s1 + $0xc] sm:$0xf]
  %v22 = vld [vmem:[%s2] sm:$0x1]
  %v24 = vlaneseq
  %v25 = vshrl.u32 %v24, 7
  %v26 = vsub.s32 0, %v25
  %v27 = vrot.slane %v22, %v26
  %v33 = vunpack.c.l.b16 %v18
  %v34 = vunpack.c.l.b16 %v19
  %v35 = vunpack.c.l.b16 %v20
  %v36 = vunpack.c.l.b16 %v21
  %v37 = vpack.c.b16 %v34, %v33
  %v38 = vpack.c.b16 %v36, %v35
  %vm41 = vcmask 261120
  %v43 = vsel %vm41, %v17, 0
  %45 = vmatprep.subr.bf16.mxu0 0
  %46 = vmatpush1.bf16.msra.mxu0 %v37
  %47 = vmatprep.subr.bf16.mxu0 0
  %48 = vmatpush1.bf16.msra.mxu0 %v38
  %49 = vmatprep.subr.bf16.mxu0 0
  %50 = vmatpush1.bf16.msra.mxu0 0
  %51 = vmatprep.subr.bf16.mxu0 0
  %52 = vmatpush1.bf16.msra.mxu0 0
  %53 = vmatprep.subr.bf16.mxu0 0
  %54 = vmatpush1.bf16.msra.mxu0 0
  %55 = vmatprep.subr.bf16.mxu0 0
  %56 = vmatpush1.bf16.msra.mxu0 0
  %57 = vmatprep.subr.bf16.mxu0 0
  %58 = vmatpush1.bf16.msra.mxu0 0
  %59 = vmatprep.subr.bf16.mxu0 0
  %60 = vmatpush1.bf16.msra.mxu0 0
  %61 = vmatprep.subr.bf16.mxu0 0
  %62 = vmatpush1.bf16.msra.mxu0 0
  %63 = vmatprep.subr.bf16.mxu0 0
  %64 = vmatpush1.bf16.msra.mxu0 0
  %65 = vmatprep.subr.bf16.mxu0 0
  %66 = vmatpush1.bf16.msra.mxu0 0
  %67 = vmatprep.subr.bf16.mxu0 0
  %68 = vmatpush1.bf16.msra.mxu0 0
  %69 = vmatprep.subr.bf16.mxu0 0
  %70 = vmatpush1.bf16.msra.mxu0 0
  %71 = vmatprep.subr.bf16.mxu0 0
  %72 = vmatpush1.bf16.msra.mxu0 0
  %73 = vmatprep.subr.bf16.mxu0 0
  %74 = vmatpush1.bf16.msra.mxu0 0
  %75 = vmatprep.subr.bf16.mxu0 0
  %76 = vmatpush1.bf16.msra.mxu0 0
  %77 = vmatprep.mubr.bf16.mxu0 0
  %78 = vmatmul.mubr.bf16.gmra.mrb[0].mxu0 %v43
  %v79 = vpop.f32.mrb[0].mxu0
  %v80 = vadd.f32 %v27, %v79
  %v81 = vpop.f32.mrb[0].mxu0
  %v82 = vpop.f32.mrb[0].mxu0
  %v83 = vadd.f32 %v27, %v82
  %v84 = vpop.f32.mrb[0].mxu0
  %85 = vdwg.mxu0
  %vm86 = vcmask 523264
  %87 = vst.msk [vmem:[%s3] sm:$0xff] %vm86, %v80
  %88 = vst.msk [vmem:[%s3 + $0x8] sm:$0xff] %vm86, %v83
  // Predicated region
  $region14: #{_lambda_.52} parent=0 // pred_check
    _
  $region15: #{_lambda_.52} parent=0 // pred_check_branch
    %90 = sbr.rel (0) target = $region17
  $region16: #{_lambda_.52} parent=0 // pred_region
    _
  $region17: #{_lambda_.52} parent=0 // pred_fallthru
    _
  // Predicated region
  $region18: #{_lambda_.52} parent=0 // pred_check
    _
  $region19: #{_lambda_.52} parent=0 // pred_check_branch
    %92 = sbr.rel (0) target = $region21
  $region20: #{_lambda_.52} parent=0 // pred_region
    _
  $region21: #{_lambda_.52} parent=0 // pred_fallthru
    _

// kernel: _lambda_.36
$region0: #{_lambda_.36}
  #allocation0 [shape = 'u32[]', space=smem, size = 0x4, offset = 0x4, fixed_abs, tag = 'smem constant byte address 0x4 - core index']
  #allocation1 [shape = 'u32[144,128]{1,0:T(1,128)}', space=vmem, size = 0x12000, scoped, tag = 'internal scratch']
  %s0 = inlined_call_operand.vmem [shape: f32[2,4,8,8], index: 0, kind: input, shape index: {}]
  %s1 = inlined_call_operand.vmem [shape: f32[2,4,8,8], index: 1, kind: input, shape index: {}]
  %s2 = inlined_call_operand.vmem [shape: f32[2,4,8,8], index: 2, kind: input, shape index: {}]
  %s3 = inlined_call_operand.vmem [shape: f32[2,1,8], index: 3, kind: input, shape index: {}]
  %s4 = inlined_call_operand.vmem [shape: f32[2,4,8,8], index: 4, kind: output, shape index: {}]
  %s5 = sld [smem:[#allocation0]]
  $region49: #{_lambda_.36} parent=0
    _
  %s7 = ssub.s32 1, %s5
  %s8 = scalar_select 0, %s7, %s5
  loop: start=0, step=1, limit=4
  $region2: #{_lambda_.36} parent=0 // loop_pre_header
    _
  $region3: #{_lambda_.36} parent=0 // loop_header
    %s10 = sphi 0, %s14
    %p11 = scmp.ge.s32.totalorder %s10, 4
    %s20 = sphi 0, %s22
    %s23 = sphi 0, %s20
    %s24 = sphi 0, %s23
    %s40 = sphi 0, %s24
    %s46 = sphi 0, %s48
    %s49 = sphi 0, %s46
    %s50 = sphi 0, %s49
    %s66 = sphi 0, %s50
    %s72 = sphi 0, %s74
    %s75 = sphi 0, %s72
    %s76 = sphi 0, %s75
    %s92 = sphi 0, %s76
    %s98 = sphi 0, %s100
    %s101 = sphi 0, %s98
    %s102 = sphi 0, %s101
    %s118 = sphi 0, %s102
    %s124 = sphi 0, %s126
    %s127 = sphi 0, %s124
    %s128 = sphi 0, %s127
    %s144 = sphi 0, %s128
  $region4: #{_lambda_.36} parent=0 // loop_header_branch
    %13 = sbr.rel (%p11) target = $region8
  $region5: #{_lambda_.36} parent=0 // loop_body
    %s15 = ssub.s32 %s10, 1
    %s16 = ssub.s32 %s10, 2
    %s17 = sadd.s32 %s10, 1
    %s18 = ssub.s32 %s10, %s17
    %p19 = scmp.eq.s32.totalorder %s18, 0
    %s21 = sadd.s32 %s20, 1
    %s22 = scalar_select %p19, %s20, %s21
    %p25 = pneg %p19
    %p26 = scmp.eq.s32.totalorder %s10, 1
    %p27 = por %p25, %p26
    %p28 = scmp.ne.s32.totalorder %s20, %s23
    %p29 = scmp.eq.s32.totalorder %s10, 0
    %p30 = por %p28, %p29
    %p31 = scmp.ne.s32.totalorder %s20, %s23
    %p32 = scmp.eq.s32.totalorder %s15, 1
    %p33 = por %p31, %p32
    %p34 = scmp.ne.s32.totalorder %s23, %s24
    %p35 = scmp.eq.s32.totalorder %s15, 0
    %p36 = por %p34, %p35
    %p37 = scmp.ne.s32.totalorder %s23, %s24
    %p38 = scmp.eq.s32.totalorder %s16, 1
    %p39 = por %p37, %p38
    %p41 = scmp.ne.s32.totalorder %s24, %s40
    %p42 = scmp.eq.s32.totalorder %s16, 0
    %p43 = por %p41, %p42
    %s44 = ssub.s32 %s10, %s17
    %p45 = scmp.eq.s32.totalorder %s44, 0
    %s47 = sadd.s32 %s46, 1
    %s48 = scalar_select %p45, %s46, %s47
    %p51 = pneg %p45
    %p52 = scmp.eq.s32.totalorder %s10, 1
    %p53 = por %p51, %p52
    %p54 = scmp.ne.s32.totalorder %s46, %s49
    %p55 = scmp.eq.s32.totalorder %s10, 0
    %p56 = por %p54, %p55
    %p57 = scmp.ne.s32.totalorder %s46, %s49
    %p58 = scmp.eq.s32.totalorder %s15, 1
    %p59 = por %p57, %p58
    %p60 = scmp.ne.s32.totalorder %s49, %s50
    %p61 = scmp.eq.s32.totalorder %s15, 0
    %p62 = por %p60, %p61
    %p63 = scmp.ne.s32.totalorder %s49, %s50
    %p64 = scmp.eq.s32.totalorder %s16, 1
    %p65 = por %p63, %p64
    %p67 = scmp.ne.s32.totalorder %s50, %s66
    %p68 = scmp.eq.s32.totalorder %s16, 0
    %p69 = por %p67, %p68
    %s70 = ssub.s32 %s10, %s17
    %p71 = scmp.eq.s32.totalorder %s70, 0
    %s73 = sadd.s32 %s72, 1
    %s74 = scalar_select %p71, %s72, %s73
    %p77 = pneg %p71
    %p78 = scmp.eq.s32.totalorder %s10, 1
    %p79 = por %p77, %p78
    %p80 = scmp.ne.s32.totalorder %s72, %s75
    %p81 = scmp.eq.s32.totalorder %s10, 0
    %p82 = por %p80, %p81
    %p83 = scmp.ne.s32.totalorder %s72, %s75
    %p84 = scmp.eq.s32.totalorder %s15, 1
    %p85 = por %p83, %p84
    %p86 = scmp.ne.s32.totalorder %s75, %s76
    %p87 = scmp.eq.s32.totalorder %s15, 0
    %p88 = por %p86, %p87
    %p89 = scmp.ne.s32.totalorder %s75, %s76
    %p90 = scmp.eq.s32.totalorder %s16, 1
    %p91 = por %p89, %p90
    %p93 = scmp.ne.s32.totalorder %s76, %s92
    %p94 = scmp.eq.s32.totalorder %s16, 0
    %p95 = por %p93, %p94
    %s96 = ssub.s32 %s10, %s17
    %p97 = scmp.eq.s32.totalorder %s96, 0
    %s99 = sadd.s32 %s98, 1
    %s100 = scalar_select %p97, %s98, %s99
    %p103 = pneg %p97
    %p104 = scmp.eq.s32.totalorder %s10, 1
    %p105 = por %p103, %p104
    %p106 = scmp.ne.s32.totalorder %s98, %s101
    %p107 = scmp.eq.s32.totalorder %s10, 0
    %p108 = por %p106, %p107
    %p109 = scmp.ne.s32.totalorder %s98, %s101
    %p110 = scmp.eq.s32.totalorder %s15, 1
    %p111 = por %p109, %p110
    %p112 = scmp.ne.s32.totalorder %s101, %s102
    %p113 = scmp.eq.s32.totalorder %s15, 0
    %p114 = por %p112, %p113
    %p115 = scmp.ne.s32.totalorder %s101, %s102
    %p116 = scmp.eq.s32.totalorder %s16, 1
    %p117 = por %p115, %p116
    %p119 = scmp.ne.s32.totalorder %s102, %s118
    %p120 = scmp.eq.s32.totalorder %s16, 0
    %p121 = por %p119, %p120
    %s122 = ssub.s32 %s10, %s17
    %p123 = scmp.eq.s32.totalorder %s122, 0
    %s125 = sadd.s32 %s124, 1
    %s126 = scalar_select %p123, %s124, %s125
    %p129 = pneg %p123
    %p130 = scmp.eq.s32.totalorder %s10, 1
    %p131 = por %p129, %p130
    %p132 = scmp.ne.s32.totalorder %s124, %s127
    %p133 = scmp.eq.s32.totalorder %s10, 0
    %p134 = por %p132, %p133
    %p135 = scmp.ne.s32.totalorder %s124, %s127
    %p136 = scmp.eq.s32.totalorder %s15, 1
    %p137 = por %p135, %p136
    %p138 = scmp.ne.s32.totalorder %s127, %s128
    %p139 = scmp.eq.s32.totalorder %s15, 0
    %p140 = por %p138, %p139
    %p141 = scmp.ne.s32.totalorder %s127, %s128
    %p142 = scmp.eq.s32.totalorder %s16, 1
    %p143 = por %p141, %p142
    %p145 = scmp.ne.s32.totalorder %s128, %s144
    %p146 = scmp.eq.s32.totalorder %s16, 0
    %p147 = por %p145, %p146
    %p148 = scmp.le.s32.totalorder 1, %s10
    %p149 = scmp.lt.s32.totalorder %s10, 3
    %p150 = pnand %p148, %p149
    %p151 = pneg %p150
    // Predicated region
    $region9: #{_lambda_.36} parent=5 // pred_check
      _
    $region10: #{_lambda_.36} parent=5 // pred_check_branch
      %153 = sbr.rel (%p150) target = $region12
    $region11: #{_lambda_.36} parent=5 // pred_region
      %s154 = ssub.s32 %s10, 1
    $region12: #{_lambda_.36} parent=5 // pred_fallthru
      _
    %p155 = scmp.lt.s32.totalorder %s10, 2
    // Predicated region
    $region13: #{_lambda_.36} parent=5 // pred_check
      %p156 = pneg %p155
    $region14: #{_lambda_.36} parent=5 // pred_check_branch
      %158 = sbr.rel (%p156) target = $region16
    $region15: #{_lambda_.36} parent=5 // pred_region
      // Predicated region
      $region17: #{_lambda_.36} parent=15 // pred_check
        %p159 = pneg %p30
      $region18: #{_lambda_.36} parent=15 // pred_check_branch
        %161 = sbr.rel (%p159) target = $region20
      $region19: #{_lambda_.36} parent=15 // pred_region
        %p162 = scmp.lt.s32.totalorder %s10, 1
        %s163 = scalar_select %p162, %s10, 1
        %s164 = smul.addr %s163, 4
        %s165 = smul.addr %s164, 8
        %s166 = scalar_lea.vmem %s0, %s165
      $region20: #{_lambda_.36} parent=15 // pred_fallthru
        _
      // Predicated region
      $region21: #{_lambda_.36} parent=15 // pred_check
        %p167 = pneg %p56
      $region22: #{_lambda_.36} parent=15 // pred_check_branch
        %169 = sbr.rel (%p167) target = $region24
      $region23: #{_lambda_.36} parent=15 // pred_region
        %p170 = scmp.lt.s32.totalorder %s10, 1
        %s171 = scalar_select %p170, %s10, 1
        %s172 = smul.addr %s171, 4
        %s173 = smul.addr %s172, 8
        %s174 = scalar_lea.vmem %s1, %s173
      $region24: #{_lambda_.36} parent=15 // pred_fallthru
        _
      // Predicated region
      $region25: #{_lambda_.36} parent=15 // pred_check
        %p175 = pneg %p82
      $region26: #{_lambda_.36} parent=15 // pred_check_branch
        %177 = sbr.rel (%p175) target = $region28
      $region27: #{_lambda_.36} parent=15 // pred_region
        %p178 = scmp.lt.s32.totalorder %s10, 1
        %s179 = scalar_select %p178, %s10, 1
        %s180 = smul.addr %s179, 4
        %s181 = smul.addr %s180, 8
        %s182 = scalar_lea.vmem %s2, %s181
      $region28: #{_lambda_.36} parent=15 // pred_fallthru
        _
      // Predicated region
      $region29: #{_lambda_.36} parent=15 // pred_check
        %p183 = pneg %p108
      $region30: #{_lambda_.36} parent=15 // pred_check_branch
        %185 = sbr.rel (%p183) target = $region32
      $region31: #{_lambda_.36} parent=15 // pred_region
        %p186 = scmp.lt.s32.totalorder %s10, 1
        %s187 = scalar_select %p186, %s10, 1
        %s188 = scalar_lea.vmem %s3, %s187
      $region32: #{_lambda_.36} parent=15 // pred_fallthru
        _
    $region16: #{_lambda_.36} parent=5 // pred_fallthru
      _
    %p189 = scmp.le.s32.totalorder 1, %s10
    %p190 = scmp.lt.s32.totalorder %s10, 3
    %p191 = pnand %p189, %p190
    %p192 = pneg %p191
    // Predicated region
    $region33: #{_lambda_.36} parent=5 // pred_check
      _
    $region34: #{_lambda_.36} parent=5 // pred_check_branch
      %194 = sbr.rel (%p191) target = $region36
    $region35: #{_lambda_.36} parent=5 // pred_region
      %s195 = ssub.s32 %s10, 1
      %p196 = scmp.lt.s32.totalorder %s15, 1
      %s197 = scalar_select %p196, %s15, 1
      %s198 = smul.addr %s197, 4
      %s199 = smul.addr %s198, 8
      %s200 = scalar_lea.vmem %s0, %s199
      %p201 = pneg %p36
      %p202 = pneg %p33
      %p203 = scmp.lt.s32.totalorder %s15, 1
      %s204 = scalar_select %p203, %s15, 1
      %s205 = smul.addr %s204, 4
      %s206 = smul.addr %s205, 8
      %s207 = scalar_lea.vmem %s1, %s206
      %p208 = pneg %p62
      %p209 = pneg %p59
      %p210 = scmp.lt.s32.totalorder %s15, 1
      %s211 = scalar_select %p210, %s15, 1
      %s212 = smul.addr %s211, 4
      %s213 = smul.addr %s212, 8
      %s214 = scalar_lea.vmem %s2, %s213
      %p215 = pneg %p88
      %p216 = pneg %p85
      %p217 = scmp.lt.s32.totalorder %s15, 1
      %s218 = scalar_select %p217, %s15, 1
      %s219 = scalar_lea.vmem %s3, %s218
      %p220 = pneg %p114
      %p221 = pneg %p111
      %p222 = pneg %p140
      %p223 = pneg %p137
      %p224 = scmp.lt.s32.totalorder %s15, 1
      %s225 = scalar_select %p224, %s15, 1
      %s226 = smul.addr %s225, 4
      %s227 = smul.addr %s226, 8
      %s228 = scalar_lea.vmem %s4, %s227
      %p229 = scmp.lt.s32.totalorder %s15, 1
      %s230 = scalar_select %p229, %s15, 1
      %s231 = smul.addr %s230, 4
      %s232 = smul.addr %s231, 8
      %s233 = scalar_lea.vmem %s0, %s232
      %p234 = scmp.lt.s32.totalorder %s15, 1
      %s235 = scalar_select %p234, %s15, 1
      %s236 = smul.addr %s235, 4
      %s237 = smul.addr %s236, 8
      %s238 = scalar_lea.vmem %s1, %s237
      %p239 = scmp.lt.s32.totalorder %s15, 1
      %s240 = scalar_select %p239, %s15, 1
      %s241 = smul.addr %s240, 4
      %s242 = smul.addr %s241, 8
      %s243 = scalar_lea.vmem %s2, %s242
      %p244 = scmp.lt.s32.totalorder %s15, 1
      %s245 = scalar_select %p244, %s15, 1
      %s246 = scalar_lea.vmem %s3, %s245
      %p247 = scmp.lt.s32.totalorder %s15, 1
      %s248 = scalar_select %p247, %s15, 1
      %s249 = smul.addr %s248, 4
      %s250 = smul.addr %s249, 8
      %s251 = scalar_lea.vmem %s4, %s250
      %v253 = vld [vmem:[%s233] sm:$0xff]
      %v254 = vld [vmem:[%s233 + $0x8] sm:$0xff]
      %v255 = vld [vmem:[%s233 + $0x10] sm:$0xff]
      %v256 = vld [vmem:[%s233 + $0x18] sm:$0xff]
      %v257 = vpack.c.bf16 %v253, %v253
      %v258 = vpack.c.bf16 %v254, %v254
      %v259 = vpack.c.bf16 %v255, %v255
      %v260 = vpack.c.bf16 %v256, %v256
      %v261 = vld [vmem:[%s238] sm:$0xff]
      %v262 = vld [vmem:[%s238 + $0x8] sm:$0xff]
      %v263 = vld [vmem:[%s238 + $0x10] sm:$0xff]
      %v264 = vld [vmem:[%s238 + $0x18] sm:$0xff]
      %v265 = vpack.c.bf16 %v261, %v261
      %v266 = vpack.c.bf16 %v262, %v262
      %v267 = vpack.c.bf16 %v263, %v263
      %v268 = vpack.c.bf16 %v264, %v264
      %v269 = vld [vmem:[%s243] sm:$0xff]
      %v270 = vld [vmem:[%s243 + $0x8] sm:$0xff]
      %v271 = vld [vmem:[%s243 + $0x10] sm:$0xff]
      %v272 = vld [vmem:[%s243 + $0x18] sm:$0xff]
      %v273 = vpack.c.bf16 %v269, %v269
      %v274 = vpack.c.bf16 %v270, %v270
      %v275 = vpack.c.bf16 %v271, %v271
      %v276 = vpack.c.bf16 %v272, %v272
      %vm277 = vcmask 64512
      %v279 = vsel %vm277, %v257, 0
      %v282 = vsel %vm277, %v265, 0
      %284 = vmatprep.subr.bf16.mxu0 0
      %285 = vmatpush1.bf16.xpose.msra.mxu0 %v282
      %286 = vmatprep.subr.bf16.mxu0 0
      %287 = vmatpush1.bf16.xpose.msra.mxu0 0
      %288 = vmatprep.subr.bf16.mxu0 0
      %289 = vmatpush1.bf16.xpose.msra.mxu0 0
      %290 = vmatprep.subr.bf16.mxu0 0
      %291 = vmatpush1.bf16.xpose.msra.mxu0 0
      %292 = vmatprep.subr.bf16.mxu0 0
      %293 = vmatpush1.bf16.xpose.msra.mxu0 0
      %294 = vmatprep.subr.bf16.mxu0 0
      %295 = vmatpush1.bf16.xpose.msra.mxu0 0
      %296 = vmatprep.subr.bf16.mxu0 0
      %297 = vmatpush1.bf16.xpose.msra.mxu0 0
      %298 = vmatprep.subr.bf16.mxu0 0
      %299 = vmatpush1.bf16.xpose.msra.mxu0 0
      %300 = vmatprep.subr.bf16.mxu0 0
      %301 = vmatpush1.bf16.xpose.msra.mxu0 0
      %302 = vmatprep.subr.bf16.mxu0 0
      %303 = vmatpush1.bf16.xpose.msra.mxu0 0
      %304 = vmatprep.subr.bf16.mxu0 0
      %305 = vmatpush1.bf16.xpose.msra.mxu0 0
      %306 = vmatprep.subr.bf16.mxu0 0
      %307 = vmatpush1.bf16.xpose.msra.mxu0 0
      %308 = vmatprep.subr.bf16.mxu0 0
      %309 = vmatpush1.bf16.xpose.msra.mxu0 0
      %310 = vmatprep.subr.bf16.mxu0 0
      %311 = vmatpush1.bf16.xpose.msra.mxu0 0
      %312 = vmatprep.subr.bf16.mxu0 0
      %313 = vmatpush1.bf16.xpose.msra.mxu0 0
      %314 = vmatprep.subr.bf16.mxu0 0
      %315 = vmatpush1.bf16.xpose.msra.mxu0 0
      %316 = vmatprep.mubr.bf16.mxu0 0
      %317 = vmatmul.mubr.bf16.gmra.mrb[0].mxu0 %v279
      %v318 = vpop.f32.mrb[0].mxu0
      %v319 = vadd.f32 0.0, %v318
      %v320 = vpop.f32.mrb[0].mxu0
      %v321 = vpop.f32.mrb[0].mxu0
      %v322 = vpop.f32.mrb[0].mxu0
      %323 = vdwg.mxu0
      %v325 = vsel %vm277, %v258, 0
      %v328 = vsel %vm277, %v266, 0
      %330 = vmatprep.subr.bf16.mxu0 0
      %331 = vmatpush1.bf16.xpose.msra.mxu0 %v328
      %332 = vmatprep.subr.bf16.mxu0 0
      %333 = vmatpush1.bf16.xpose.msra.mxu0 0
      %334 = vmatprep.subr.bf16.mxu0 0
      %335 = vmatpush1.bf16.xpose.msra.mxu0 0
      %336 = vmatprep.subr.bf16.mxu0 0
      %337 = vmatpush1.bf16.xpose.msra.mxu0 0
      %338 = vmatprep.subr.bf16.mxu0 0
      %339 = vmatpush1.bf16.xpose.msra.mxu0 0
      %340 = vmatprep.subr.bf16.mxu0 0
      %341 = vmatpush1.bf16.xpose.msra.mxu0 0
      %342 = vmatprep.subr.bf16.mxu0 0
      %343 = vmatpush1.bf16.xpose.msra.mxu0 0
      %344 = vmatprep.subr.bf16.mxu0 0
      %345 = vmatpush1.bf16.xpose.msra.mxu0 0
      %346 = vmatprep.subr.bf16.mxu0 0
      %347 = vmatpush1.bf16.xpose.msra.mxu0 0
      %348 = vmatprep.subr.bf16.mxu0 0
      %349 = vmatpush1.bf16.xpose.msra.mxu0 0
      %350 = vmatprep.subr.bf16.mxu0 0
      %351 = vmatpush1.bf16.xpose.msra.mxu0 0
      %352 = vmatprep.subr.bf16.mxu0 0
      %353 = vmatpush1.bf16.xpose.msra.mxu0 0
      %354 = vmatprep.subr.bf16.mxu0 0
      %355 = vmatpush1.bf16.xpose.msra.mxu0 0
      %356 = vmatprep.subr.bf16.mxu0 0
      %357 = vmatpush1.bf16.xpose.msra.mxu0 0
      %358 = vmatprep.subr.bf16.mxu0 0
      %359 = vmatpush1.bf16.xpose.msra.mxu0 0
      %360 = vmatprep.subr.bf16.mxu0 0
      %361 = vmatpush1.bf16.xpose.msra.mxu0 0
      %362 = vmatprep.mubr.bf16.mxu0 0
      %363 = vmatmul.mubr.bf16.gmra.mrb[0].mxu0 %v325
      %v364 = vpop.f32.mrb[0].mxu0
      %v365 = vadd.f32 0.0, %v364
      %v366 = vpop.f32.mrb[0].mxu0
      %v367 = vpop.f32.mrb[0].mxu0
      %v368 = vpop.f32.mrb[0].mxu0
      %369 = vdwg.mxu0
      %v371 = vsel %vm277, %v259, 0
      %v374 = vsel %vm277, %v267, 0
      %376 = vmatprep.subr.bf16.mxu0 0
      %377 = vmatpush1.bf16.xpose.msra.mxu0 %v374
      %378 = vmatprep.subr.bf16.mxu0 0
      %379 = vmatpush1.bf16.xpose.msra.mxu0 0
      %380 = vmatprep.subr.bf16.mxu0 0
      %381 = vmatpush1.bf16.xpose.msra.mxu0 0
      %382 = vmatprep.subr.bf16.mxu0 0
      %383 = vmatpush1.bf16.xpose.msra.mxu0 0
      %384 = vmatprep.subr.bf16.mxu0 0
      %385 = vmatpush1.bf16.xpose.msra.mxu0 0
      %386 = vmatprep.subr.bf16.mxu0 0
      %387 = vmatpush1.bf16.xpose.msra.mxu0 0
      %388 = vmatprep.subr.bf16.mxu0 0
      %389 = vmatpush1.bf16.xpose.msra.mxu0 0
      %390 = vmatprep.subr.bf16.mxu0 0
      %391 = vmatpush1.bf16.xpose.msra.mxu0 0
      %392 = vmatprep.subr.bf16.mxu0 0
      %393 = vmatpush1.bf16.xpose.msra.mxu0 0
      %394 = vmatprep.subr.bf16.mxu0 0
      %395 = vmatpush1.bf16.xpose.msra.mxu0 0
      %396 = vmatprep.subr.bf16.mxu0 0
      %397 = vmatpush1.bf16.xpose.msra.mxu0 0
      %398 = vmatprep.subr.bf16.mxu0 0
      %399 = vmatpush1.bf16.xpose.msra.mxu0 0
      %400 = vmatprep.subr.bf16.mxu0 0
      %401 = vmatpush1.bf16.xpose.msra.mxu0 0
      %402 = vmatprep.subr.bf16.mxu0 0
      %403 = vmatpush1.bf16.xpose.msra.mxu0 0
      %404 = vmatprep.subr.bf16.mxu0 0
      %405 = vmatpush1.bf16.xpose.msra.mxu0 0
      %406 = vmatprep.subr.bf16.mxu0 0
      %407 = vmatpush1.bf16.xpose.msra.mxu0 0
      %408 = vmatprep.mubr.bf16.mxu0 0
      %409 = vmatmul.mubr.bf16.gmra.mrb[0].mxu0 %v371
      %v410 = vpop.f32.mrb[0].mxu0
      %v411 = vadd.f32 0.0, %v410
      %v412 = vpop.f32.mrb[0].mxu0
      %v413 = vpop.f32.mrb[0].mxu0
      %v414 = vpop.f32.mrb[0].mxu0
      %415 = vdwg.mxu0
      %v417 = vsel %vm277, %v260, 0
      %v420 = vsel %vm277, %v268, 0
      %422 = vmatprep.subr.bf16.mxu0 0
      %423 = vmatpush1.bf16.xpose.msra.mxu0 %v420
      %424 = vmatprep.subr.bf16.mxu0 0
      %425 = vmatpush1.bf16.xpose.msra.mxu0 0
      %426 = vmatprep.subr.bf16.mxu0 0
      %427 = vmatpush1.bf16.xpose.msra.mxu0 0
      %428 = vmatprep.subr.bf16.mxu0 0
      %429 = vmatpush1.bf16.xpose.msra.mxu0 0
      %430 = vmatprep.subr.bf16.mxu0 0
      %431 = vmatpush1.bf16.xpose.msra.mxu0 0
      %432 = vmatprep.subr.bf16.mxu0 0
      %433 = vmatpush1.bf16.xpose.msra.mxu0 0
      %434 = vmatprep.subr.bf16.mxu0 0
      %435 = vmatpush1.bf16.xpose.msra.mxu0 0
      %436 = vmatprep.subr.bf16.mxu0 0
      %437 = vmatpush1.bf16.xpose.msra.mxu0 0
      %438 = vmatprep.subr.bf16.mxu0 0
      %439 = vmatpush1.bf16.xpose.msra.mxu0 0
      %440 = vmatprep.subr.bf16.mxu0 0
      %441 = vmatpush1.bf16.xpose.msra.mxu0 0
      %442 = vmatprep.subr.bf16.mxu0 0
      %443 = vmatpush1.bf16.xpose.msra.mxu0 0
      %444 = vmatprep.subr.bf16.mxu0 0
      %445 = vmatpush1.bf16.xpose.msra.mxu0 0
      %446 = vmatprep.subr.bf16.mxu0 0
      %447 = vmatpush1.bf16.xpose.msra.mxu0 0
      %448 = vmatprep.subr.bf16.mxu0 0
      %449 = vmatpush1.bf16.xpose.msra.mxu0 0
      %450 = vmatprep.subr.bf16.mxu0 0
      %451 = vmatpush1.bf16.xpose.msra.mxu0 0
      %452 = vmatprep.subr.bf16.mxu0 0
      %453 = vmatpush1.bf16.xpose.msra.mxu0 0
      %454 = vmatprep.mubr.bf16.mxu0 0
      %455 = vmatmul.mubr.bf16.gmra.mrb[0].mxu0 %v417
      %v456 = vpop.f32.mrb[0].mxu0
      %v457 = vadd.f32 0.0, %v456
      %v458 = vpop.f32.mrb[0].mxu0
      %v459 = vpop.f32.mrb[0].mxu0
      %v460 = vpop.f32.mrb[0].mxu0
      %461 = vdwg.mxu0
      %v462 = vmul.f32 %v319, 0.35355338
      %v463 = vmul.f32 %v365, 0.35355338
      %v464 = vmul.f32 %v411, 0.35355338
      %v465 = vmul.f32 %v457, 0.35355338
      %v466 = vld [vmem:[%s246] sm:$0x1]
      %vm467 = vcmp.ne.f32.partialorder %v466, 0.0
      %v468 = vsel %vm467, 1, 0
      %v469 = vlaneseq
      %v470 = vshrl.u32 %v469, 7
      %v471 = vsub.s32 0, %v470
      %v472 = vrot.slane %v468, %v471
      %vm473 = vcmp.eq.s32.totalorder %v472, 1
      %v474 = vsel %vm473, %v462, -1e+09
      %v475 = vsel %vm473, %v463, -1e+09
      %v476 = vsel %vm473, %v464, -1e+09
      %v477 = vsel %vm473, %v465, -1e+09
      %v478 = vsel %vm277, %v474, -inf
      %479 = vmax.xlane.f32.xlu0 %v478
      %v480 = vpop.xlane.xlu0 %479
      %v481 = vsel %vm277, %v475, -inf
      %482 = vmax.xlane.f32.xlu0 %v481
      %v483 = vpop.xlane.xlu0 %482
      %v484 = vsel %vm277, %v476, -inf
      %485 = vmax.xlane.f32.xlu0 %v484
      %v486 = vpop.xlane.xlu0 %485
      %v487 = vsel %vm277, %v477, -inf
      %488 = vmax.xlane.f32.xlu0 %v487
      %v489 = vpop.xlane.xlu0 %488
      %v490 = vsub.f32 %v474, %v480
      %v491 = vsub.f32 %v475, %v483
      %v492 = vsub.f32 %v476, %v486
      %v493 = vsub.f32 %v477, %v489
      %v494 = vmul.f32 %v490, 1.442695
      %v495 = vpow.pop %v494
      %v496 = vmul.f32 %v491, 1.442695
      %v497 = vpow.pop %v496
      %v498 = vmul.f32 %v492, 1.442695
      %v499 = vpow.pop %v498
      %v500 = vmul.f32 %v493, 1.442695
      %v501 = vpow.pop %v500
      %v502 = vsel %vm277, %v495, 0.0
      %503 = vadd.xlane.f32.xlu0 %v502
      %v504 = vpop.xlane.xlu0 %503
      %v505 = vsel %vm277, %v497, 0.0
      %506 = vadd.xlane.f32.xlu0 %v505
      %v507 = vpop.xlane.xlu0 %506
      %v508 = vsel %vm277, %v499, 0.0
      %509 = vadd.xlane.f32.xlu0 %v508
      %v510 = vpop.xlane.xlu0 %509
      %v511 = vsel %vm277, %v501, 0.0
      %512 = vadd.xlane.f32.xlu0 %v511
      %v513 = vpop.xlane.xlu0 %512
      %v514 = vrcp.pop %v504
      %v515 = vrcp.pop %v507
      %v516 = vrcp.pop %v510
      %v517 = vrcp.pop %v513
      %v518 = vmul.f32 %v495, %v514
      %v519 = vmul.f32 %v497, %v515
      %v520 = vmul.f32 %v499, %v516
      %v521 = vmul.f32 %v501, %v517
      %v522 = vpack.c.bf16 %v518, %v518
      %v523 = vpack.c.bf16 %v519, %v519
      %v524 = vpack.c.bf16 %v520, %v520
      %v525 = vpack.c.bf16 %v521, %v521
      %v527 = vsel %vm277, %v522, 0
      %vm529 = vcmask 1043456
      %v531 = vsel %vm529, %v273, 0
      %533 = vmatprep.subr.bf16.mxu0 0
      %534 = vmatpush1.bf16.msra.mxu0 %v531
      %535 = vmatprep.subr.bf16.mxu0 0
      %536 = vmatpush1.bf16.msra.mxu0 0
      %537 = vmatprep.subr.bf16.mxu0 0
      %538 = vmatpush1.bf16.msra.mxu0 0
      %539 = vmatprep.subr.bf16.mxu0 0
      %540 = vmatpush1.bf16.msra.mxu0 0
      %541 = vmatprep.subr.bf16.mxu0 0
      %542 = vmatpush1.bf16.msra.mxu0 0
      %543 = vmatprep.subr.bf16.mxu0 0
      %544 = vmatpush1.bf16.msra.mxu0 0
      %545 = vmatprep.subr.bf16.mxu0 0
      %546 = vmatpush1.bf16.msra.mxu0 0
      %547 = vmatprep.subr.bf16.mxu0 0
      %548 = vmatpush1.bf16.msra.mxu0 0
      %549 = vmatprep.subr.bf16.mxu0 0
      %550 = vmatpush1.bf16.msra.mxu0 0
      %551 = vmatprep.subr.bf16.mxu0 0
      %552 = vmatpush1.bf16.msra.mxu0 0
      %553 = vmatprep.subr.bf16.mxu0 0
      %554 = vmatpush1.bf16.msra.mxu0 0
      %555 = vmatprep.subr.bf16.mxu0 0
      %556 = vmatpush1.bf16.msra.mxu0 0
      %557 = vmatprep.subr.bf16.mxu0 0
      %558 = vmatpush1.bf16.msra.mxu0 0
      %559 = vmatprep.subr.bf16.mxu0 0
      %560 = vmatpush1.bf16.msra.mxu0 0
      %561 = vmatprep.subr.bf16.mxu0 0
      %562 = vmatpush1.bf16.msra.mxu0 0
      %563 = vmatprep.subr.bf16.mxu0 0
      %564 = vmatpush1.bf16.msra.mxu0 0
      %565 = vmatprep.mubr.bf16.mxu0 0
      %566 = vmatmul.mubr.bf16.gmra.mrb[0].mxu0 %v527
      %v567 = vpop.f32.mrb[0].mxu0
      %v568 = vadd.f32 0.0, %v567
      %v569 = vpop.f32.mrb[0].mxu0
      %v570 = vpop.f32.mrb[0].mxu0
      %v571 = vpop.f32.mrb[0].mxu0
      %572 = vdwg.mxu0
      %v574 = vsel %vm277, %v523, 0
      %v577 = vsel %vm529, %v274, 0
      %579 = vmatprep.subr.bf16.mxu0 0
      %580 = vmatpush1.bf16.msra.mxu0 %v577
      %581 = vmatprep.subr.bf16.mxu0 0
      %582 = vmatpush1.bf16.msra.mxu0 0
      %583 = vmatprep.subr.bf16.mxu0 0
      %584 = vmatpush1.bf16.msra.mxu0 0
      %585 = vmatprep.subr.bf16.mxu0 0
      %586 = vmatpush1.bf16.msra.mxu0 0
      %587 = vmatprep.subr.bf16.mxu0 0
      %588 = vmatpush1.bf16.msra.mxu0 0
      %589 = vmatprep.subr.bf16.mxu0 0
      %590 = vmatpush1.bf16.msra.mxu0 0
      %591 = vmatprep.subr.bf16.mxu0 0
      %592 = vmatpush1.bf16.msra.mxu0 0
      %593 = vmatprep.subr.bf16.mxu0 0
      %594 = vmatpush1.bf16.msra.mxu0 0
      %595 = vmatprep.subr.bf16.mxu0 0
      %596 = vmatpush1.bf16.msra.mxu0 0
      %597 = vmatprep.subr.bf16.mxu0 0
      %598 = vmatpush1.bf16.msra.mxu0 0
      %599 = vmatprep.subr.bf16.mxu0 0
      %600 = vmatpush1.bf16.msra.mxu0 0
      %601 = vmatprep.subr.bf16.mxu0 0
      %602 = vmatpush1.bf16.msra.mxu0 0
      %603 = vmatprep.subr.bf16.mxu0 0
      %604 = vmatpush1.bf16.msra.mxu0 0
      %605 = vmatprep.subr.bf16.mxu0 0
      %606 = vmatpush1.bf16.msra.mxu0 0
      %607 = vmatprep.subr.bf16.mxu0 0
      %608 = vmatpush1.bf16.msra.mxu0 0
      %609 = vmatprep.subr.bf16.mxu0 0
      %610 = vmatpush1.bf16.msra.mxu0 0
      %611 = vmatprep.mubr.bf16.mxu0 0
      %612 = vmatmul.mubr.bf16.gmra.mrb[0].mxu0 %v574
      %v613 = vpop.f32.mrb[0].mxu0
      %v614 = vadd.f32 0.0, %v613
      %v615 = vpop.f32.mrb[0].mxu0
      %v616 = vpop.f32.mrb[0].mxu0
      %v617 = vpop.f32.mrb[0].mxu0
      %618 = vdwg.mxu0
      %v620 = vsel %vm277, %v524, 0
      %v623 = vsel %vm529, %v275, 0
      %625 = vmatprep.subr.bf16.mxu0 0
      %626 = vmatpush1.bf16.msra.mxu0 %v623
      %627 = vmatprep.subr.bf16.mxu0 0
      %628 = vmatpush1.bf16.msra.mxu0 0
      %629 = vmatprep.subr.bf16.mxu0 0
      %630 = vmatpush1.bf16.msra.mxu0 0
      %631 = vmatprep.subr.bf16.mxu0 0
      %632 = vmatpush1.bf16.msra.mxu0 0
      %633 = vmatprep.subr.bf16.mxu0 0
      %634 = vmatpush1.bf16.msra.mxu0 0
      %635 = vmatprep.subr.bf16.mxu0 0
      %636 = vmatpush1.bf16.msra.mxu0 0
      %637 = vmatprep.subr.bf16.mxu0 0
      %638 = vmatpush1.bf16.msra.mxu0 0
      %639 = vmatprep.subr.bf16.mxu0 0
      %640 = vmatpush1.bf16.msra.mxu0 0
      %641 = vmatprep.subr.bf16.mxu0 0
      %642 = vmatpush1.bf16.msra.mxu0 0
      %643 = vmatprep.subr.bf16.mxu0 0
      %644 = vmatpush1.bf16.msra.mxu0 0
      %645 = vmatprep.subr.bf16.mxu0 0
      %646 = vmatpush1.bf16.msra.mxu0 0
      %647 = vmatprep.subr.bf16.mxu0 0
      %648 = vmatpush1.bf16.msra.mxu0 0
      %649 = vmatprep.subr.bf16.mxu0 0
      %650 = vmatpush1.bf16.msra.mxu0 0
      %651 = vmatprep.subr.bf16.mxu0 0
      %652 = vmatpush1.bf16.msra.mxu0 0
      %653 = vmatprep.subr.bf16.mxu0 0
      %654 = vmatpush1.bf16.msra.mxu0 0
      %655 = vmatprep.subr.bf16.mxu0 0
      %656 = vmatpush1.bf16.msra.mxu0 0
      %657 = vmatprep.mubr.bf16.mxu0 0
      %658 = vmatmul.mubr.bf16.gmra.mrb[0].mxu0 %v620
      %v659 = vpop.f32.mrb[0].mxu0
      %v660 = vadd.f32 0.0, %v659
      %v661 = vpop.f32.mrb[0].mxu0
      %v662 = vpop.f32.mrb[0].mxu0
      %v663 = vpop.f32.mrb[0].mxu0
      %664 = vdwg.mxu0
      %v666 = vsel %vm277, %v525, 0
      %v669 = vsel %vm529, %v276, 0
      %671 = vmatprep.subr.bf16.mxu0 0
      %672 = vmatpush1.bf16.msra.mxu0 %v669
      %673 = vmatprep.subr.bf16.mxu0 0
      %674 = vmatpush1.bf16.msra.mxu0 0
      %675 = vmatprep.subr.bf16.mxu0 0
      %676 = vmatpush1.bf16.msra.mxu0 0
      %677 = vmatprep.subr.bf16.mxu0 0
      %678 = vmatpush1.bf16.msra.mxu0 0
      %679 = vmatprep.subr.bf16.mxu0 0
      %680 = vmatpush1.bf16.msra.mxu0 0
      %681 = vmatprep.subr.bf16.mxu0 0
      %682 = vmatpush1.bf16.msra.mxu0 0
      %683 = vmatprep.subr.bf16.mxu0 0
      %684 = vmatpush1.bf16.msra.mxu0 0
      %685 = vmatprep.subr.bf16.mxu0 0
      %686 = vmatpush1.bf16.msra.mxu0 0
      %687 = vmatprep.subr.bf16.mxu0 0
      %688 = vmatpush1.bf16.msra.mxu0 0
      %689 = vmatprep.subr.bf16.mxu0 0
      %690 = vmatpush1.bf16.msra.mxu0 0
      %691 = vmatprep.subr.bf16.mxu0 0
      %692 = vmatpush1.bf16.msra.mxu0 0
      %693 = vmatprep.subr.bf16.mxu0 0
      %694 = vmatpush1.bf16.msra.mxu0 0
      %695 = vmatprep.subr.bf16.mxu0 0
      %696 = vmatpush1.bf16.msra.mxu0 0
      %697 = vmatprep.subr.bf16.mxu0 0
      %698 = vmatpush1.bf16.msra.mxu0 0
      %699 = vmatprep.subr.bf16.mxu0 0
      %700 = vmatpush1.bf16.msra.mxu0 0
      %701 = vmatprep.subr.bf16.mxu0 0
      %702 = vmatpush1.bf16.msra.mxu0 0
      %703 = vmatprep.mubr.bf16.mxu0 0
      %704 = vmatmul.mubr.bf16.gmra.mrb[0].mxu0 %v666
      %v705 = vpop.f32.mrb[0].mxu0
      %v706 = vadd.f32 0.0, %v705
      %v707 = vpop.f32.mrb[0].mxu0
      %v708 = vpop.f32.mrb[0].mxu0
      %v709 = vpop.f32.mrb[0].mxu0
      %710 = vdwg.mxu0
      %711 = vst.msk [vmem:[%s251] sm:$0xff] %vm277, %v568
      %712 = vst.msk [vmem:[%s251 + $0x8] sm:$0xff] %vm277, %v614
      %713 = vst.msk [vmem:[%s251 + $0x10] sm:$0xff] %vm277, %v660
      %714 = vst.msk [vmem:[%s251 + $0x18] sm:$0xff] %vm277, %v706
      %p715 = scmp.lt.s32.totalorder %s15, 1
      %s716 = scalar_select %p715, %s15, 1
      %s717 = smul.addr %s716, 4
      %s718 = smul.addr %s717, 8
      %s719 = scalar_lea.vmem %s4, %s718
      // Predicated region
      $region37: #{_lambda_.36} parent=35 // pred_check
        %p720 = pneg %p137
      $region38: #{_lambda_.36} parent=35 // pred_check_branch
        %722 = sbr.rel (%p720) target = $region40
      $region39: #{_lambda_.36} parent=35 // pred_region
        _
      $region40: #{_lambda_.36} parent=35 // pred_fallthru
        _
    $region36: #{_lambda_.36} parent=5 // pred_fallthru
      _
    %p723 = scmp.le.s32.totalorder 2, %s10
    // Predicated region
    $region41: #{_lambda_.36} parent=5 // pred_check
      %p724 = pneg %p723
    $region42: #{_lambda_.36} parent=5 // pred_check_branch
      %726 = sbr.rel (%p724) target = $region44
    $region43: #{_lambda_.36} parent=5 // pred_region
      %s727 = ssub.s32 %s10, 2
      // Predicated region
      $region45: #{_lambda_.36} parent=43 // pred_check
        %p728 = pneg %p143
      $region46: #{_lambda_.36} parent=43 // pred_check_branch
        %730 = sbr.rel (%p728) target = $region48
      $region47: #{_lambda_.36} parent=43 // pred_region
        %p731 = scmp.lt.s32.totalorder %s16, 1
        %s732 = scalar_select %p731, %s16, 1
        %s733 = smul.addr %s732, 4
        %s734 = smul.addr %s733, 8
        %s735 = scalar_lea.vmem %s4, %s734
      $region48: #{_lambda_.36} parent=43 // pred_fallthru
        _
    $region44: #{_lambda_.36} parent=5 // pred_fallthru
      _
  $region6: #{_lambda_.36} parent=0 // loop_footer
    %s14 = sadd.s32 1, %s10
  $region7: #{_lambda_.36} parent=0 // loop_footer_branch
    %9 = sbr.rel target = $region3
  $region8: #{_lambda_.36} parent=0 // loop_exit
    _

// kernel: _lambda_.69
$region0: #{_lambda_.69}
  #allocation0 [shape = 'u32[]', space=smem, size = 0x4, offset = 0x4, fixed_abs, tag = 'smem constant byte address 0x4 - core index']
  #allocation1 [shape = 'u32[144,128]{1,0:T(1,128)}', space=vmem, size = 0x12000, scoped, tag = 'internal scratch']
  %s0 = inlined_call_operand.vmem [shape: f32[16,32], index: 0, kind: input, shape index: {}]
  %s1 = inlined_call_operand.vmem [shape: bf16[32,50], index: 1, kind: input, shape index: {}]
  %s2 = inlined_call_operand.vmem [shape: f32[1,50], index: 2, kind: input, shape index: {}]
  %s3 = inlined_call_operand.hbm [shape: f32[16,50], index: 3, kind: output, shape index: {}]
  %s4 = sld [smem:[#allocation0]]
  $region22: #{_lambda_.69} parent=0
    _
  %s6 = ssub.s32 1, %s4
  %s7 = scalar_select 0, %s6, %s4
  $region1: #{_lambda_.69} parent=0
    #allocation2 [shape = 'u8[8192]{0}', space=vmem, size = 0x2000, scoped, tag = 'output window, operand 0, single buffered']
    #allocation3 [shape = 's32[1]{0}', space=sflag, size = 0x4, scoped, tag = 'scoped memory for _lambda_.69']
    %8 = vsyncpa [#allocation3], 0
    // Predicated region
    $region2: #{_lambda_.69} parent=1 // pred_check
      _
    $region3: #{_lambda_.69} parent=1 // pred_check_branch
      %10 = sbr.rel (0) target = $region5
    $region4: #{_lambda_.69} parent=1 // pred_region
      _
    $region5: #{_lambda_.69} parent=1 // pred_fallthru
      _
    // Predicated region
    $region6: #{_lambda_.69} parent=1 // pred_check
      _
    $region7: #{_lambda_.69} parent=1 // pred_check_branch
      %12 = sbr.rel (0) target = $region9
    $region8: #{_lambda_.69} parent=1 // pred_region
      _
    $region9: #{_lambda_.69} parent=1 // pred_fallthru
      _
    // Predicated region
    $region10: #{_lambda_.69} parent=1 // pred_check
      _
    $region11: #{_lambda_.69} parent=1 // pred_check_branch
      %14 = sbr.rel (0) target = $region13
    $region12: #{_lambda_.69} parent=1 // pred_region
      _
    $region13: #{_lambda_.69} parent=1 // pred_fallthru
      _
    %v16 = vld [vmem:[%s0] sm:$0xff]
    %v17 = vld [vmem:[%s0 + $0x8] sm:$0xff]
    %v18 = vpack.c.bf16 %v17, %v16
    %v19 = vld [vmem:[%s1] sm:$0xf]
    %v20 = vld [vmem:[%s1 + $0x4] sm:$0xf]
    %v21 = vld [vmem:[%s1 + $0x8] sm:$0xf]
    %v22 = vld [vmem:[%s1 + $0xc] sm:$0xf]
    %v23 = vld [vmem:[%s2] sm:$0x1]
    %v25 = vlaneseq
    %v26 = vshrl.u32 %v25, 7
    %v27 = vsub.s32 0, %v26
    %v28 = vrot.slane %v23, %v27
    %v34 = vunpack.c.l.b16 %v19
    %v35 = vunpack.c.l.b16 %v20
    %v36 = vunpack.c.l.b16 %v21
    %v37 = vunpack.c.l.b16 %v22
    %v38 = vpack.c.b16 %v35, %v34
    %v39 = vpack.c.b16 %v37, %v36
    %vm42 = vcmask 261120
    %v44 = vsel %vm42, %v18, 0
    %46 = vmatprep.subr.bf16.mxu0 0
    %47 = vmatpush1.bf16.msra.mxu0 %v38
    %48 = vmatprep.subr.bf16.mxu0 0
    %49 = vmatpush1.bf16.msra.mxu0 %v39
    %50 = vmatprep.subr.bf16.mxu0 0
    %51 = vmatpush1.bf16.msra.mxu0 0
    %52 = vmatprep.subr.bf16.mxu0 0
    %53 = vmatpush1.bf16.msra.mxu0 0
    %54 = vmatprep.subr.bf16.mxu0 0
    %55 = vmatpush1.bf16.msra.mxu0 0
    %56 = vmatprep.subr.bf16.mxu0 0
    %57 = vmatpush1.bf16.msra.mxu0 0
    %58 = vmatprep.subr.bf16.mxu0 0
    %59 = vmatpush1.bf16.msra.mxu0 0
    %60 = vmatprep.subr.bf16.mxu0 0
    %61 = vmatpush1.bf16.msra.mxu0 0
    %62 = vmatprep.subr.bf16.mxu0 0
    %63 = vmatpush1.bf16.msra.mxu0 0
    %64 = vmatprep.subr.bf16.mxu0 0
    %65 = vmatpush1.bf16.msra.mxu0 0
    %66 = vmatprep.subr.bf16.mxu0 0
    %67 = vmatpush1.bf16.msra.mxu0 0
    %68 = vmatprep.subr.bf16.mxu0 0
    %69 = vmatpush1.bf16.msra.mxu0 0
    %70 = vmatprep.subr.bf16.mxu0 0
    %71 = vmatpush1.bf16.msra.mxu0 0
    %72 = vmatprep.subr.bf16.mxu0 0
    %73 = vmatpush1.bf16.msra.mxu0 0
    %74 = vmatprep.subr.bf16.mxu0 0
    %75 = vmatpush1.bf16.msra.mxu0 0
    %76 = vmatprep.subr.bf16.mxu0 0
    %77 = vmatpush1.bf16.msra.mxu0 0
    %78 = vmatprep.mubr.bf16.mxu0 0
    %79 = vmatmul.mubr.bf16.gmra.mrb[0].mxu0 %v44
    %v80 = vpop.f32.mrb[0].mxu0
    %v81 = vadd.f32 %v28, %v80
    %v82 = vpop.f32.mrb[0].mxu0
    %v83 = vpop.f32.mrb[0].mxu0
    %v84 = vadd.f32 %v28, %v83
    %v85 = vpop.f32.mrb[0].mxu0
    %86 = vdwg.mxu0
    %vm87 = vcmask 408576
    %88 = vst.msk [vmem:[#allocation2] sm:$0xff] %vm87, %v81
    %89 = vst.msk [vmem:[#allocation2 + $0x8] sm:$0xff] %vm87, %v84
    // Predicated region
    $region14: #{_lambda_.69} parent=1 // pred_check
      _
    $region15: #{_lambda_.69} parent=1 // pred_check_branch
      %91 = sbr.rel (0) target = $region17
    $region16: #{_lambda_.69} parent=1 // pred_region
      %s93 = ssub.s32 256, 256
      %94 = vsyncadd [#allocation3], %s93
      %s95 = sshll.u32 [#allocation2], 4
      %s96 = int_to_ptr.vmem [resolvable:$true] %s95
      %101 = dma.vmem_to_hbm [thread:$0]  %s96, 256, %s3, [#allocation3], 128, 128, 8
    $region17: #{_lambda_.69} parent=1 // pred_fallthru
      _
    // Predicated region
    $region18: #{_lambda_.69} parent=1 // pred_check
      _
    $region19: #{_lambda_.69} parent=1 // pred_check_branch
      %103 = sbr.rel (0) target = $region21
    $region20: #{_lambda_.69} parent=1 // pred_region
      %104 = dma.done [#allocation3], 256
    $region21: #{_lambda_.69} parent=1 // pred_fallthru
      _
    %105 = vsyncpa [#allocation3], 1

</llo_original>
